<compile_context>
chip_gen: v5e
topology: v5e:2x2
jax: 0.10.0
libtpu: 0.0.40
codegen_flags: <defaults>
</compile_context>

<pallas_src>
import jax
import jax.numpy as jnp
from jax.experimental import pallas as pl
from jax.experimental.pallas import tpu as pltpu

# ---- model config, consistent with CoCoModel.__init__ ----
NENTITY     = 128
NRELATION   = 16
HIDDEN_DIM  = 32                           # entity/relation/embedding dim
EMB_DIM1    = 4
EMB_DIM2    = HIDDEN_DIM // EMB_DIM1       # 8
OH, OW      = EMB_DIM1 - 2, EMB_DIM2 - 2   # 3x3 VALID conv -> 2 x 6
NPATCH      = OH * OW                      # 12
NCH         = 32                           # conv output channels
HIDDEN_SIZE = NCH * NPATCH                 # fc input size = 384
EPS         = 1e-5
NBRANCH     = 4                            # (e1_real, e1_img, rel_real, rel_img)
TB          = 8                            # batch tile (one (8,128) output block per step)


# ---------------- the fused Pallas kernel ----------------

def fused_forward_kernel(e1_ref, rel_ref,
                         er_tab_ref, ei_tab_ref, rr_tab_ref, ri_tab_ref,
                         cw_ref, cb_ref, fw_ref, fb_ref, sw_ref, sb_ref,
                         o_ref):
    # e1/rel:   (TB, 1) int32 index blocks for this grid step
    # *_tab:    VMEM-resident f32 embedding tables (128,32)/(128,32)/(16,32)/(16,32)
    # cw:       (4, 32, 384) bf16   folded [bn0 -> im2col-conv -> bn1] per branch
    # cb:       (4, 1, 384)  f32
    # fw:       (4, 384, 32) bf16   folded [fc -> bn2] per branch
    # fb:       (4, 1, 32)   f32
    # sw:       (128, 128)   bf16   stacked [Wr.T; Wi.T; Wi.T; -Wr.T]
    # sb:       (1, 128)     f32

    def gather(idx_ref, tab_ref, nrows):
        # one-hot row gather on the MXU (robust, no XLA gather op needed)
        onehot = (idx_ref[...] ==
                  jax.lax.broadcasted_iota(jnp.int32, (TB, nrows), 1)).astype(jnp.float32)
        return jnp.dot(onehot, tab_ref[...], preferred_element_type=jnp.float32)   # (TB, 32)

    xs = (gather(e1_ref,  er_tab_ref, NENTITY),
          gather(e1_ref,  ei_tab_ref, NENTITY),
          gather(rel_ref, rr_tab_ref, NRELATION),
          gather(rel_ref, ri_tab_ref, NRELATION))

    hs = []
    for br in range(NBRANCH):                                   # unrolled, tiny dots
        cw = cw_ref[br].astype(jnp.float32)                     # (32, 384)
        fw = fw_ref[br].astype(jnp.float32)                     # (384, 32)
        feat = jnp.dot(xs[br], cw, preferred_element_type=jnp.float32) + cb_ref[br]
        feat = jnp.maximum(feat, 0.0)                           # (TB, 384)
        h = jnp.dot(feat, fw, preferred_element_type=jnp.float32) + fb_ref[br]
        hs.append(jnp.maximum(h, 0.0))                          # (TB, 32)
    er, ei, rr, ri = hs

    prods = jnp.concatenate([er * rr, er * ri, ei * rr, ei * ri], axis=1)     # (TB, 128)
    sw = sw_ref[...].astype(jnp.float32)
    pred = jnp.dot(prods, sw, preferred_element_type=jnp.float32) + sb_ref[...]
    o_ref[...] = jax.nn.sigmoid(pred)


def fused_forward(e1, rel, params, fused):
    B = int(e1.shape[0])
    assert B % TB == 0, f"batch ({B}) must be a multiple of {TB}"
    grid = (B // TB,)

    e1_2d = e1.reshape(B, 1).astype(jnp.int32)
    rel_2d = rel.reshape(B, 1).astype(jnp.int32)

    # advisory cost estimate (hygiene; helps XLA schedule around the custom call)
    flops_per_row = 2 * (2 * NENTITY * HIDDEN_DIM + 2 * NRELATION * HIDDEN_DIM
                         + 2 * NBRANCH * HIDDEN_SIZE * HIDDEN_DIM
                         + NBRANCH * HIDDEN_DIM * NENTITY)
    param_bytes = sum(int(v.size) * v.dtype.itemsize for v in fused.values())
    table_bytes = sum(int(params[k].size) * 4
                      for k in ('ent_real', 'ent_img', 'rel_real', 'rel_img'))
    cost = pl.CostEstimate(flops=B * flops_per_row,
                           transcendentals=B * NENTITY,
                           bytes_accessed=param_bytes + table_bytes + B * (2 * 4 + NENTITY * 4))

    return pl.pallas_call(
        fused_forward_kernel,
        out_shape=jax.ShapeDtypeStruct((B, NENTITY), jnp.float32),
        grid_spec=pltpu.PrefetchScalarGridSpec(
            num_scalar_prefetch=0,
            grid=grid,
            in_specs=[
                # streamed per grid step
                pl.BlockSpec((TB, 1), lambda b: (b, 0)),                                # e1
                pl.BlockSpec((TB, 1), lambda b: (b, 0)),                                # rel
                # VMEM-resident (constant index_map) across the whole grid
                pl.BlockSpec((NENTITY, HIDDEN_DIM), lambda b: (0, 0)),                  # ent_real
                pl.BlockSpec((NENTITY, HIDDEN_DIM), lambda b: (0, 0)),                  # ent_img
                pl.BlockSpec((NRELATION, HIDDEN_DIM), lambda b: (0, 0)),                # rel_real
                pl.BlockSpec((NRELATION, HIDDEN_DIM), lambda b: (0, 0)),                # rel_img
                pl.BlockSpec((NBRANCH, HIDDEN_DIM, HIDDEN_SIZE), lambda b: (0, 0, 0)),  # conv_w
                pl.BlockSpec((NBRANCH, 1, HIDDEN_SIZE), lambda b: (0, 0, 0)),           # conv_b
                pl.BlockSpec((NBRANCH, HIDDEN_SIZE, HIDDEN_DIM), lambda b: (0, 0, 0)),  # fc_w
                pl.BlockSpec((NBRANCH, 1, HIDDEN_DIM), lambda b: (0, 0, 0)),            # fc_b
                pl.BlockSpec((NBRANCH * HIDDEN_DIM, NENTITY), lambda b: (0, 0)),        # score_w
                pl.BlockSpec((1, NENTITY), lambda b: (0, 0)),                           # score_b
            ],
            out_specs=pl.BlockSpec((TB, NENTITY), lambda b: (b, 0)),
        ),
        compiler_params=pltpu.CompilerParams(dimension_semantics=("parallel",)),
        cost_estimate=cost,
    )(e1_2d, rel_2d,
      params['ent_real'], params['ent_img'], params['rel_real'], params['rel_img'],
      fused['conv_w'], fused['conv_b'], fused['fc_w'], fused['fc_b'],
      fused['score_w'], fused['score_b'])


def coco_forward(params, fused, e1, rel):
    # everything (gather, conv, fc, scoring, sigmoid) happens inside the kernel
    return fused_forward(e1, rel, params, fused)


# ---------------- static weight preparation (BN folds, im2col fold, per-branch stacks) ----------------

def bn_fold(gamma, beta, mean=0.0, var=1.0):
    # TODO(synk): if real running stats are ever loaded, pass them here instead of the
    # fresh-model defaults mean=0 / var=1 (the fold itself is unchanged).
    scale = gamma / jnp.sqrt(var + EPS)
    return scale, beta - mean * scale


def _im2col_selector():
    # S[f, p, k] = 1 iff flat input position f == (h+dh)*EMB_DIM2 + (w+dw),
    # with p = h*OW + w, k = dh*3 + dw
    h = jnp.arange(OH)[:, None, None, None]
    w = jnp.arange(OW)[None, :, None, None]
    dh = jnp.arange(3)[None, None, :, None]
    dw = jnp.arange(3)[None, None, None, :]
    tgt = ((h + dh) * EMB_DIM2 + (w + dw)).reshape(NPATCH, 9)       # (12, 9)
    f = jnp.arange(HIDDEN_DIM)[:, None, None]
    return (f == tgt[None]).astype(jnp.float32)                     # (32, 12, 9)


def prepare_fused_weights(params):
    s0, b0 = bn_fold(params['bn0_gamma'], params['bn0_beta'])
    g1, s1 = bn_fold(params['bn1_gamma'], params['bn1_beta'])
    g2, s2 = bn_fold(params['bn2_gamma'], params['bn2_beta'])
    S = _im2col_selector()
    g1c = jnp.repeat(g1, NPATCH)       # per conv output column (channel-major c*NPATCH + p)
    s1c = jnp.repeat(s1, NPATCH)

    conv_ws, conv_bs, fc_ws, fc_bs = [], [], [], []
    for i in range(1, 5):
        Wflat = params[f'conv{i}_w'].reshape(NCH, 9)                              # (32, 9)
        # dense im2col-conv matrix; columns ordered channel-major (matches PyTorch .view(bs,-1))
        M = jnp.einsum('fpk,ck->fcp', S, Wflat,
                       precision=jax.lax.Precision.HIGHEST).reshape(HIDDEN_DIM, HIDDEN_SIZE)
        # fold bn0:  conv(x*s0 + b0) = s0*(x@M) + b0*colsum(M) + conv_b
        bias = jnp.repeat(params[f'conv{i}_b'], NPATCH) + b0 * M.sum(axis=0)
        M = s0 * M
        # fold bn1 (per channel)
        conv_ws.append(M * g1c[None, :])
        conv_bs.append(bias * g1c + s1c)
        # fc with bn2 folded
        fc_ws.append(params[f'fc{i}_w'].T * g2[None, :])                          # (384, 32)
        fc_bs.append(params[f'fc{i}_b'] * g2 + s2)

    wr_t = params['ent_real'].T                                                    # (32, 128)
    wi_t = params['ent_img'].T
    return {
        'conv_w':  jnp.stack(conv_ws).astype(jnp.bfloat16),                        # (4, 32, 384)
        'conv_b':  jnp.stack(conv_bs).reshape(NBRANCH, 1, HIDDEN_SIZE),            # (4, 1, 384) f32
        'fc_w':    jnp.stack(fc_ws).astype(jnp.bfloat16),                          # (4, 384, 32)
        'fc_b':    jnp.stack(fc_bs).reshape(NBRANCH, 1, HIDDEN_DIM),               # (4, 1, 32)  f32
        'score_w': jnp.concatenate([wr_t, wi_t, wi_t, -wr_t],
                                   axis=0).astype(jnp.bfloat16),                   # (128, 128)
        'score_b': params['b'].reshape(1, NENTITY),                                # (1, 128)    f32
    }


# ---------------- parameters (deterministic, synthetic) ----------------

def init_params(key):
    ks = jax.random.split(key, 16)

    def xavier_normal(k, shape):
        fan_out, fan_in = shape[0], shape[1]
        std = (2.0 / (fan_in + fan_out)) ** 0.5
        return std * jax.random.normal(k, shape, jnp.float32)

    params = {
        'ent_real': xavier_normal(ks[0], (NENTITY, HIDDEN_DIM)).at[0].set(0.0),   # padding_idx=0
        'ent_img':  xavier_normal(ks[1], (NENTITY, HIDDEN_DIM)).at[0].set(0.0),
        'rel_real': xavier_normal(ks[2], (NRELATION, HIDDEN_DIM)).at[0].set(0.0),
        'rel_img':  xavier_normal(ks[3], (NRELATION, HIDDEN_DIM)).at[0].set(0.0),
    }
    for n, i in enumerate(range(1, 5)):
        params[f'conv{i}_w'] = 0.1 * jax.random.normal(ks[4 + n], (NCH, 1, 3, 3), jnp.float32)
        params[f'conv{i}_b'] = 0.05 * jax.random.normal(ks[8 + n], (NCH,), jnp.float32)
        params[f'fc{i}_w'] = (1.0 / jnp.sqrt(HIDDEN_SIZE)) * jax.random.normal(
            jax.random.fold_in(ks[12], i), (HIDDEN_DIM, HIDDEN_SIZE), jnp.float32)
        params[f'fc{i}_b'] = 0.05 * jax.random.normal(
            jax.random.fold_in(ks[13], i), (HIDDEN_DIM,), jnp.float32)

    # BatchNorm affine params; running stats mean=0, var=1 (fresh model, eval mode); dropouts identity
    params['bn0_gamma'] = jnp.float32(1.1)
    params['bn0_beta']  = jnp.float32(0.05)
    params['bn1_gamma'] = 1.0 + 0.1 * jax.random.normal(ks[14], (NCH,), jnp.float32)
    params['bn1_beta']  = 0.05 * jax.random.normal(jax.random.fold_in(ks[14], 1), (NCH,), jnp.float32)
    params['bn2_gamma'] = 1.0 + 0.1 * jax.random.normal(ks[15], (HIDDEN_DIM,), jnp.float32)
    params['bn2_beta']  = 0.05 * jax.random.normal(jax.random.fold_in(ks[15], 1), (HIDDEN_DIM,), jnp.float32)
    params['b'] = jnp.zeros((NENTITY,), jnp.float32)   # the registered parameter 'b'
    return params


# ---------------- pure-JAX references for verification ----------------

def fused_reference(params, fused, e1, rel):
    # exact replica of the kernel math (incl. bf16 weight rounding), in plain JAX
    hp = jax.lax.Precision.HIGHEST
    xs = (params['ent_real'][e1], params['ent_img'][e1],
          params['rel_real'][rel], params['rel_img'][rel])
    hs = []
    for br in range(NBRANCH):
        cw = fused['conv_w'][br].astype(jnp.float32)
        fw = fused['fc_w'][br].astype(jnp.float32)
        feat = jnp.maximum(jnp.dot(xs[br], cw, precision=hp) + fused['conv_b'][br], 0.0)
        hs.append(jnp.maximum(jnp.dot(feat, fw, precision=hp) + fused['fc_b'][br], 0.0))
    er, ei, rr, ri = hs
    prods = jnp.concatenate([er * rr, er * ri, ei * rr, ei * ri], axis=1)
    pred = jnp.dot(prods, fused['score_w'].astype(jnp.float32), precision=hp) + fused['score_b']
    return jax.nn.sigmoid(pred)


def reference_forward(params, e1, rel):
    # full f32 un-fused module forward (eval mode)
    s0, b0 = bn_fold(params['bn0_gamma'], params['bn0_beta'])
    g1, s1 = bn_fold(params['bn1_gamma'], params['bn1_beta'])
    g2, s2 = bn_fold(params['bn2_gamma'], params['bn2_beta'])

    def branch(x, wk, bk, fwk, fbk):
        x = x.reshape(-1, 1, EMB_DIM1, EMB_DIM2) * s0 + b0
        y = jax.lax.conv_general_dilated(x, params[wk], (1, 1), 'VALID',
                                         dimension_numbers=('NCHW', 'OIHW', 'NCHW'))
        y = y + params[bk].reshape(1, NCH, 1, 1)
        y = jnp.maximum(y * g1.reshape(1, NCH, 1, 1) + s1.reshape(1, NCH, 1, 1), 0.0)
        y = y.reshape(y.shape[0], -1)
        z = y @ params[fwk].T + params[fbk]
        return jnp.maximum(z * g2 + s2, 0.0)

    er = branch(params['ent_real'][e1], 'conv1_w', 'conv1_b', 'fc1_w', 'fc1_b')
    ei = branch(params['ent_img'][e1],  'conv2_w', 'conv2_b', 'fc2_w', 'fc2_b')
    rr = branch(params['rel_real'][rel], 'conv3_w', 'conv3_b', 'fc3_w', 'fc3_b')
    ri = branch(params['rel_img'][rel],  'conv4_w', 'conv4_b', 'fc4_w', 'fc4_b')

    wr_t, wi_t = params['ent_real'].T, params['ent_img'].T
    pred = (er * rr) @ wr_t + (er * ri) @ wi_t + (ei * rr) @ wi_t - (ei * ri) @ wr_t
    pred = pred + params['b'][None, :]
    return jax.nn.sigmoid(pred)


if __name__ == "__main__":
    key = jax.random.PRNGKey(0)
    pkey, k1, k2 = jax.random.split(key, 3)
    params = init_params(pkey)

    B = 32                                            # 4 grid steps of 8
    e1 = jax.random.randint(k1, (B,), 0, NENTITY, dtype=jnp.int32)
    rel = jax.random.randint(k2, (B,), 0, NRELATION, dtype=jnp.int32)

    fused = jax.tree_util.tree_map(jax.block_until_ready, prepare_fused_weights(params))

    pred = jax.block_until_ready(coco_forward(params, fused, e1, rel))

    assert pred.shape == (B, NENTITY)
    assert bool(jnp.all(jnp.isfinite(pred)))

    # 1) exactness of the kernel vs a pure-JAX replica of the same fused (bf16-weight) math
    ref_fused = jax.block_until_ready(fused_reference(params, fused, e1, rel))
    err_fused = float(jnp.max(jnp.abs(pred - ref_fused)))
    assert err_fused < 5e-3, f"kernel vs fused reference mismatch: {err_fused}"

    # 2) fidelity vs the full un-fused f32 module forward (difference = bf16 weight rounding)
    ref_full = jax.block_until_ready(reference_forward(params, e1, rel))
    err_full = float(jnp.max(jnp.abs(pred - ref_full)))
    assert err_full < 3e-2, f"kernel vs f32 module reference mismatch: {err_full}"

    print("KERNEL_OK")
</pallas_src>

<mosaic_0001>
module attributes {stable_mosaic.version = 11 : i64} {
  func.func @fused_forward_kernel(%arg0: i32, %arg1: memref<8x1xi32, #tpu.memory_space<vmem>>, %arg2: memref<8x1xi32, #tpu.memory_space<vmem>>, %arg3: memref<128x32xf32, #tpu.memory_space<vmem>>, %arg4: memref<128x32xf32, #tpu.memory_space<vmem>>, %arg5: memref<16x32xf32, #tpu.memory_space<vmem>>, %arg6: memref<16x32xf32, #tpu.memory_space<vmem>>, %arg7: memref<4x32x384xbf16, #tpu.memory_space<vmem>>, %arg8: memref<4x1x384xf32, #tpu.memory_space<vmem>>, %arg9: memref<4x384x32xbf16, #tpu.memory_space<vmem>>, %arg10: memref<4x1x32xf32, #tpu.memory_space<vmem>>, %arg11: memref<128x128xbf16, #tpu.memory_space<vmem>>, %arg12: memref<1x128xf32, #tpu.memory_space<vmem>>, %arg13: memref<8x128xf32, #tpu.memory_space<vmem>>) attributes {dimension_semantics = [#tpu.dimension_semantics<parallel>], iteration_bounds = array<i64: 4>, scalar_prefetch = 0 : i64, scratch_operands = 0 : i64, tpu.core_type = #tpu.core_type<tc>, window_params = [{transform_indices = @transform_0, window_bounds = array<i64: 8, 1>}, {transform_indices = @transform_1, window_bounds = array<i64: 8, 1>}, {pipeline_mode = #tpu.pipeline_mode<synchronous>, transform_indices = @transform_2, window_bounds = array<i64: 128, 32>}, {pipeline_mode = #tpu.pipeline_mode<synchronous>, transform_indices = @transform_3, window_bounds = array<i64: 128, 32>}, {pipeline_mode = #tpu.pipeline_mode<synchronous>, transform_indices = @transform_4, window_bounds = array<i64: 16, 32>}, {pipeline_mode = #tpu.pipeline_mode<synchronous>, transform_indices = @transform_5, window_bounds = array<i64: 16, 32>}, {pipeline_mode = #tpu.pipeline_mode<synchronous>, transform_indices = @transform_6, window_bounds = array<i64: 4, 32, 384>}, {pipeline_mode = #tpu.pipeline_mode<synchronous>, transform_indices = @transform_7, window_bounds = array<i64: 4, 1, 384>}, {pipeline_mode = #tpu.pipeline_mode<synchronous>, transform_indices = @transform_8, window_bounds = array<i64: 4, 384, 32>}, {pipeline_mode = #tpu.pipeline_mode<synchronous>, transform_indices = @transform_9, window_bounds = array<i64: 4, 1, 32>}, {pipeline_mode = #tpu.pipeline_mode<synchronous>, transform_indices = @transform_10, window_bounds = array<i64: 128, 128>}, {pipeline_mode = #tpu.pipeline_mode<synchronous>, transform_indices = @transform_11, window_bounds = array<i64: 1, 128>}, {transform_indices = @transform_12, window_bounds = array<i64: 8, 128>}]} {
    %c0 = arith.constant 0 : index
    %c0_0 = arith.constant 0 : index
    %0 = vector.load %arg1[%c0, %c0_0] : memref<8x1xi32, #tpu.memory_space<vmem>>, vector<8x1xi32>
    %1 = tpu.iota {dimensions = array<i32: 1>} : vector<8x128xi32>
    %2 = vector.broadcast %0 : vector<8x1xi32> to vector<8x128xi32>
    %3 = arith.cmpi eq, %2, %1 : vector<8x128xi32>
    %4 = arith.extui %3 : vector<8x128xi1> to vector<8x128xi32>
    %5 = arith.sitofp %4 : vector<8x128xi32> to vector<8x128xf32>
    %c0_1 = arith.constant 0 : index
    %c0_2 = arith.constant 0 : index
    %6 = vector.load %arg3[%c0_1, %c0_2] : memref<128x32xf32, #tpu.memory_space<vmem>>, vector<128x32xf32>
    %cst = arith.constant dense<0.000000e+00> : vector<8x32xf32>
    %7 = tpu.matmul %5, %6, %cst {dimension_numbers = #tpu.dot_dimension_numbers<[1], [0], [0], [1], [0, 0, 1, 1], [], []>} : vector<8x128xf32>, vector<128x32xf32>, vector<8x32xf32> -> vector<8x32xf32>
    %c0_3 = arith.constant 0 : index
    %c0_4 = arith.constant 0 : index
    %8 = vector.load %arg1[%c0_3, %c0_4] : memref<8x1xi32, #tpu.memory_space<vmem>>, vector<8x1xi32>
    %9 = tpu.iota {dimensions = array<i32: 1>} : vector<8x128xi32>
    %10 = vector.broadcast %8 : vector<8x1xi32> to vector<8x128xi32>
    %11 = arith.cmpi eq, %10, %9 : vector<8x128xi32>
    %12 = arith.extui %11 : vector<8x128xi1> to vector<8x128xi32>
    %13 = arith.sitofp %12 : vector<8x128xi32> to vector<8x128xf32>
    %c0_5 = arith.constant 0 : index
    %c0_6 = arith.constant 0 : index
    %14 = vector.load %arg4[%c0_5, %c0_6] : memref<128x32xf32, #tpu.memory_space<vmem>>, vector<128x32xf32>
    %cst_7 = arith.constant dense<0.000000e+00> : vector<8x32xf32>
    %15 = tpu.matmul %13, %14, %cst_7 {dimension_numbers = #tpu.dot_dimension_numbers<[1], [0], [0], [1], [0, 0, 1, 1], [], []>} : vector<8x128xf32>, vector<128x32xf32>, vector<8x32xf32> -> vector<8x32xf32>
    %c0_8 = arith.constant 0 : index
    %c0_9 = arith.constant 0 : index
    %16 = vector.load %arg2[%c0_8, %c0_9] : memref<8x1xi32, #tpu.memory_space<vmem>>, vector<8x1xi32>
    %17 = tpu.iota {dimensions = array<i32: 1>} : vector<8x16xi32>
    %18 = vector.broadcast %16 : vector<8x1xi32> to vector<8x16xi32>
    %19 = arith.cmpi eq, %18, %17 : vector<8x16xi32>
    %20 = arith.extui %19 : vector<8x16xi1> to vector<8x16xi32>
    %21 = arith.sitofp %20 : vector<8x16xi32> to vector<8x16xf32>
    %c0_10 = arith.constant 0 : index
    %c0_11 = arith.constant 0 : index
    %22 = vector.load %arg5[%c0_10, %c0_11] : memref<16x32xf32, #tpu.memory_space<vmem>>, vector<16x32xf32>
    %cst_12 = arith.constant dense<0.000000e+00> : vector<8x32xf32>
    %23 = tpu.matmul %21, %22, %cst_12 {dimension_numbers = #tpu.dot_dimension_numbers<[1], [0], [0], [1], [0, 0, 1, 1], [], []>} : vector<8x16xf32>, vector<16x32xf32>, vector<8x32xf32> -> vector<8x32xf32>
    %c0_13 = arith.constant 0 : index
    %c0_14 = arith.constant 0 : index
    %24 = vector.load %arg2[%c0_13, %c0_14] : memref<8x1xi32, #tpu.memory_space<vmem>>, vector<8x1xi32>
    %25 = tpu.iota {dimensions = array<i32: 1>} : vector<8x16xi32>
    %26 = vector.broadcast %24 : vector<8x1xi32> to vector<8x16xi32>
    %27 = arith.cmpi eq, %26, %25 : vector<8x16xi32>
    %28 = arith.extui %27 : vector<8x16xi1> to vector<8x16xi32>
    %29 = arith.sitofp %28 : vector<8x16xi32> to vector<8x16xf32>
    %c0_15 = arith.constant 0 : index
    %c0_16 = arith.constant 0 : index
    %30 = vector.load %arg6[%c0_15, %c0_16] : memref<16x32xf32, #tpu.memory_space<vmem>>, vector<16x32xf32>
    %cst_17 = arith.constant dense<0.000000e+00> : vector<8x32xf32>
    %31 = tpu.matmul %29, %30, %cst_17 {dimension_numbers = #tpu.dot_dimension_numbers<[1], [0], [0], [1], [0, 0, 1, 1], [], []>} : vector<8x16xf32>, vector<16x32xf32>, vector<8x32xf32> -> vector<8x32xf32>
    %c0_18 = arith.constant 0 : index
    %c0_19 = arith.constant 0 : index
    %c0_20 = arith.constant 0 : index
    %32 = vector.load %arg7[%c0_18, %c0_19, %c0_20] : memref<4x32x384xbf16, #tpu.memory_space<vmem>>, vector<1x32x384xbf16>
    %33 = vector.shape_cast %32 : vector<1x32x384xbf16> to vector<32x384xbf16>
    %34 = arith.extf %33 : vector<32x384xbf16> to vector<32x384xf32>
    %c0_21 = arith.constant 0 : index
    %c0_22 = arith.constant 0 : index
    %c0_23 = arith.constant 0 : index
    %35 = vector.load %arg9[%c0_21, %c0_22, %c0_23] : memref<4x384x32xbf16, #tpu.memory_space<vmem>>, vector<1x384x32xbf16>
    %36 = vector.shape_cast %35 : vector<1x384x32xbf16> to vector<384x32xbf16>
    %37 = arith.extf %36 : vector<384x32xbf16> to vector<384x32xf32>
    %cst_24 = arith.constant dense<0.000000e+00> : vector<8x384xf32>
    %38 = tpu.matmul %7, %34, %cst_24 {dimension_numbers = #tpu.dot_dimension_numbers<[1], [0], [0], [1], [0, 0, 1, 1], [], []>} : vector<8x32xf32>, vector<32x384xf32>, vector<8x384xf32> -> vector<8x384xf32>
    %c0_25 = arith.constant 0 : index
    %c0_26 = arith.constant 0 : index
    %c0_27 = arith.constant 0 : index
    %39 = vector.load %arg8[%c0_25, %c0_26, %c0_27] : memref<4x1x384xf32, #tpu.memory_space<vmem>>, vector<1x1x384xf32>
    %40 = vector.shape_cast %39 : vector<1x1x384xf32> to vector<1x384xf32>
    %41 = vector.broadcast %40 : vector<1x384xf32> to vector<8x384xf32>
    %42 = arith.addf %38, %41 : vector<8x384xf32>
    %cst_28 = arith.constant 0.000000e+00 : f32
    %43 = vector.broadcast %cst_28 : f32 to vector<8x384xf32>
    %44 = arith.maximumf %42, %43 : vector<8x384xf32>
    %cst_29 = arith.constant dense<0.000000e+00> : vector<8x32xf32>
    %45 = tpu.matmul %44, %37, %cst_29 {dimension_numbers = #tpu.dot_dimension_numbers<[1], [0], [0], [1], [0, 0, 1, 1], [], []>} : vector<8x384xf32>, vector<384x32xf32>, vector<8x32xf32> -> vector<8x32xf32>
    %c0_30 = arith.constant 0 : index
    %c0_31 = arith.constant 0 : index
    %c0_32 = arith.constant 0 : index
    %46 = vector.load %arg10[%c0_30, %c0_31, %c0_32] : memref<4x1x32xf32, #tpu.memory_space<vmem>>, vector<1x1x32xf32>
    %47 = vector.shape_cast %46 : vector<1x1x32xf32> to vector<1x32xf32>
    %48 = vector.broadcast %47 : vector<1x32xf32> to vector<8x32xf32>
    %49 = arith.addf %45, %48 : vector<8x32xf32>
    %cst_33 = arith.constant 0.000000e+00 : f32
    %50 = vector.broadcast %cst_33 : f32 to vector<8x32xf32>
    %51 = arith.maximumf %49, %50 : vector<8x32xf32>
    %c1 = arith.constant 1 : index
    %c0_34 = arith.constant 0 : index
    %c0_35 = arith.constant 0 : index
    %52 = vector.load %arg7[%c1, %c0_34, %c0_35] : memref<4x32x384xbf16, #tpu.memory_space<vmem>>, vector<1x32x384xbf16>
    %53 = vector.shape_cast %52 : vector<1x32x384xbf16> to vector<32x384xbf16>
    %54 = arith.extf %53 : vector<32x384xbf16> to vector<32x384xf32>
    %c1_36 = arith.constant 1 : index
    %c0_37 = arith.constant 0 : index
    %c0_38 = arith.constant 0 : index
    %55 = vector.load %arg9[%c1_36, %c0_37, %c0_38] : memref<4x384x32xbf16, #tpu.memory_space<vmem>>, vector<1x384x32xbf16>
    %56 = vector.shape_cast %55 : vector<1x384x32xbf16> to vector<384x32xbf16>
    %57 = arith.extf %56 : vector<384x32xbf16> to vector<384x32xf32>
    %cst_39 = arith.constant dense<0.000000e+00> : vector<8x384xf32>
    %58 = tpu.matmul %15, %54, %cst_39 {dimension_numbers = #tpu.dot_dimension_numbers<[1], [0], [0], [1], [0, 0, 1, 1], [], []>} : vector<8x32xf32>, vector<32x384xf32>, vector<8x384xf32> -> vector<8x384xf32>
    %c1_40 = arith.constant 1 : index
    %c0_41 = arith.constant 0 : index
    %c0_42 = arith.constant 0 : index
    %59 = vector.load %arg8[%c1_40, %c0_41, %c0_42] : memref<4x1x384xf32, #tpu.memory_space<vmem>>, vector<1x1x384xf32>
    %60 = vector.shape_cast %59 : vector<1x1x384xf32> to vector<1x384xf32>
    %61 = vector.broadcast %60 : vector<1x384xf32> to vector<8x384xf32>
    %62 = arith.addf %58, %61 : vector<8x384xf32>
    %cst_43 = arith.constant 0.000000e+00 : f32
    %63 = vector.broadcast %cst_43 : f32 to vector<8x384xf32>
    %64 = arith.maximumf %62, %63 : vector<8x384xf32>
    %cst_44 = arith.constant dense<0.000000e+00> : vector<8x32xf32>
    %65 = tpu.matmul %64, %57, %cst_44 {dimension_numbers = #tpu.dot_dimension_numbers<[1], [0], [0], [1], [0, 0, 1, 1], [], []>} : vector<8x384xf32>, vector<384x32xf32>, vector<8x32xf32> -> vector<8x32xf32>
    %c1_45 = arith.constant 1 : index
    %c0_46 = arith.constant 0 : index
    %c0_47 = arith.constant 0 : index
    %66 = vector.load %arg10[%c1_45, %c0_46, %c0_47] : memref<4x1x32xf32, #tpu.memory_space<vmem>>, vector<1x1x32xf32>
    %67 = vector.shape_cast %66 : vector<1x1x32xf32> to vector<1x32xf32>
    %68 = vector.broadcast %67 : vector<1x32xf32> to vector<8x32xf32>
    %69 = arith.addf %65, %68 : vector<8x32xf32>
    %cst_48 = arith.constant 0.000000e+00 : f32
    %70 = vector.broadcast %cst_48 : f32 to vector<8x32xf32>
    %71 = arith.maximumf %69, %70 : vector<8x32xf32>
    %c2 = arith.constant 2 : index
    %c0_49 = arith.constant 0 : index
    %c0_50 = arith.constant 0 : index
    %72 = vector.load %arg7[%c2, %c0_49, %c0_50] : memref<4x32x384xbf16, #tpu.memory_space<vmem>>, vector<1x32x384xbf16>
    %73 = vector.shape_cast %72 : vector<1x32x384xbf16> to vector<32x384xbf16>
    %74 = arith.extf %73 : vector<32x384xbf16> to vector<32x384xf32>
    %c2_51 = arith.constant 2 : index
    %c0_52 = arith.constant 0 : index
    %c0_53 = arith.constant 0 : index
    %75 = vector.load %arg9[%c2_51, %c0_52, %c0_53] : memref<4x384x32xbf16, #tpu.memory_space<vmem>>, vector<1x384x32xbf16>
    %76 = vector.shape_cast %75 : vector<1x384x32xbf16> to vector<384x32xbf16>
    %77 = arith.extf %76 : vector<384x32xbf16> to vector<384x32xf32>
    %cst_54 = arith.constant dense<0.000000e+00> : vector<8x384xf32>
    %78 = tpu.matmul %23, %74, %cst_54 {dimension_numbers = #tpu.dot_dimension_numbers<[1], [0], [0], [1], [0, 0, 1, 1], [], []>} : vector<8x32xf32>, vector<32x384xf32>, vector<8x384xf32> -> vector<8x384xf32>
    %c2_55 = arith.constant 2 : index
    %c0_56 = arith.constant 0 : index
    %c0_57 = arith.constant 0 : index
    %79 = vector.load %arg8[%c2_55, %c0_56, %c0_57] : memref<4x1x384xf32, #tpu.memory_space<vmem>>, vector<1x1x384xf32>
    %80 = vector.shape_cast %79 : vector<1x1x384xf32> to vector<1x384xf32>
    %81 = vector.broadcast %80 : vector<1x384xf32> to vector<8x384xf32>
    %82 = arith.addf %78, %81 : vector<8x384xf32>
    %cst_58 = arith.constant 0.000000e+00 : f32
    %83 = vector.broadcast %cst_58 : f32 to vector<8x384xf32>
    %84 = arith.maximumf %82, %83 : vector<8x384xf32>
    %cst_59 = arith.constant dense<0.000000e+00> : vector<8x32xf32>
    %85 = tpu.matmul %84, %77, %cst_59 {dimension_numbers = #tpu.dot_dimension_numbers<[1], [0], [0], [1], [0, 0, 1, 1], [], []>} : vector<8x384xf32>, vector<384x32xf32>, vector<8x32xf32> -> vector<8x32xf32>
    %c2_60 = arith.constant 2 : index
    %c0_61 = arith.constant 0 : index
    %c0_62 = arith.constant 0 : index
    %86 = vector.load %arg10[%c2_60, %c0_61, %c0_62] : memref<4x1x32xf32, #tpu.memory_space<vmem>>, vector<1x1x32xf32>
    %87 = vector.shape_cast %86 : vector<1x1x32xf32> to vector<1x32xf32>
    %88 = vector.broadcast %87 : vector<1x32xf32> to vector<8x32xf32>
    %89 = arith.addf %85, %88 : vector<8x32xf32>
    %cst_63 = arith.constant 0.000000e+00 : f32
    %90 = vector.broadcast %cst_63 : f32 to vector<8x32xf32>
    %91 = arith.maximumf %89, %90 : vector<8x32xf32>
    %c3 = arith.constant 3 : index
    %c0_64 = arith.constant 0 : index
    %c0_65 = arith.constant 0 : index
    %92 = vector.load %arg7[%c3, %c0_64, %c0_65] : memref<4x32x384xbf16, #tpu.memory_space<vmem>>, vector<1x32x384xbf16>
    %93 = vector.shape_cast %92 : vector<1x32x384xbf16> to vector<32x384xbf16>
    %94 = arith.extf %93 : vector<32x384xbf16> to vector<32x384xf32>
    %c3_66 = arith.constant 3 : index
    %c0_67 = arith.constant 0 : index
    %c0_68 = arith.constant 0 : index
    %95 = vector.load %arg9[%c3_66, %c0_67, %c0_68] : memref<4x384x32xbf16, #tpu.memory_space<vmem>>, vector<1x384x32xbf16>
    %96 = vector.shape_cast %95 : vector<1x384x32xbf16> to vector<384x32xbf16>
    %97 = arith.extf %96 : vector<384x32xbf16> to vector<384x32xf32>
    %cst_69 = arith.constant dense<0.000000e+00> : vector<8x384xf32>
    %98 = tpu.matmul %31, %94, %cst_69 {dimension_numbers = #tpu.dot_dimension_numbers<[1], [0], [0], [1], [0, 0, 1, 1], [], []>} : vector<8x32xf32>, vector<32x384xf32>, vector<8x384xf32> -> vector<8x384xf32>
    %c3_70 = arith.constant 3 : index
    %c0_71 = arith.constant 0 : index
    %c0_72 = arith.constant 0 : index
    %99 = vector.load %arg8[%c3_70, %c0_71, %c0_72] : memref<4x1x384xf32, #tpu.memory_space<vmem>>, vector<1x1x384xf32>
    %100 = vector.shape_cast %99 : vector<1x1x384xf32> to vector<1x384xf32>
    %101 = vector.broadcast %100 : vector<1x384xf32> to vector<8x384xf32>
    %102 = arith.addf %98, %101 : vector<8x384xf32>
    %cst_73 = arith.constant 0.000000e+00 : f32
    %103 = vector.broadcast %cst_73 : f32 to vector<8x384xf32>
    %104 = arith.maximumf %102, %103 : vector<8x384xf32>
    %cst_74 = arith.constant dense<0.000000e+00> : vector<8x32xf32>
    %105 = tpu.matmul %104, %97, %cst_74 {dimension_numbers = #tpu.dot_dimension_numbers<[1], [0], [0], [1], [0, 0, 1, 1], [], []>} : vector<8x384xf32>, vector<384x32xf32>, vector<8x32xf32> -> vector<8x32xf32>
    %c3_75 = arith.constant 3 : index
    %c0_76 = arith.constant 0 : index
    %c0_77 = arith.constant 0 : index
    %106 = vector.load %arg10[%c3_75, %c0_76, %c0_77] : memref<4x1x32xf32, #tpu.memory_space<vmem>>, vector<1x1x32xf32>
    %107 = vector.shape_cast %106 : vector<1x1x32xf32> to vector<1x32xf32>
    %108 = vector.broadcast %107 : vector<1x32xf32> to vector<8x32xf32>
    %109 = arith.addf %105, %108 : vector<8x32xf32>
    %cst_78 = arith.constant 0.000000e+00 : f32
    %110 = vector.broadcast %cst_78 : f32 to vector<8x32xf32>
    %111 = arith.maximumf %109, %110 : vector<8x32xf32>
    %112 = arith.mulf %51, %91 : vector<8x32xf32>
    %113 = arith.mulf %51, %111 : vector<8x32xf32>
    %114 = arith.mulf %71, %91 : vector<8x32xf32>
    %115 = arith.mulf %71, %111 : vector<8x32xf32>
    %116 = tpu.concatenate %112, %113, %114, %115 in 1 : vector<8x32xf32>, vector<8x32xf32>, vector<8x32xf32>, vector<8x32xf32> -> vector<8x128xf32>
    %c0_79 = arith.constant 0 : index
    %c0_80 = arith.constant 0 : index
    %117 = vector.load %arg11[%c0_79, %c0_80] : memref<128x128xbf16, #tpu.memory_space<vmem>>, vector<128x128xbf16>
    %118 = arith.extf %117 : vector<128x128xbf16> to vector<128x128xf32>
    %cst_81 = arith.constant dense<0.000000e+00> : vector<8x128xf32>
    %119 = tpu.matmul %116, %118, %cst_81 {dimension_numbers = #tpu.dot_dimension_numbers<[1], [0], [0], [1], [0, 0, 1, 1], [], []>} : vector<8x128xf32>, vector<128x128xf32>, vector<8x128xf32> -> vector<8x128xf32>
    %c0_82 = arith.constant 0 : index
    %c0_83 = arith.constant 0 : index
    %120 = vector.load %arg12[%c0_82, %c0_83] : memref<1x128xf32, #tpu.memory_space<vmem>>, vector<1x128xf32>
    %121 = vector.broadcast %120 : vector<1x128xf32> to vector<8x128xf32>
    %122 = arith.addf %119, %121 : vector<8x128xf32>
    %123 = arith.negf %122 : vector<8x128xf32>
    %124 = math.exp %123 : vector<8x128xf32>
    %cst_84 = arith.constant 1.000000e+00 : f32
    %125 = vector.broadcast %cst_84 : f32 to vector<8x128xf32>
    %126 = arith.addf %125, %124 : vector<8x128xf32>
    %127 = arith.divf %125, %126 : vector<8x128xf32>
    %c0_85 = arith.constant 0 : index
    %c0_86 = arith.constant 0 : index
    %128 = vector.load %arg13[%c0_85, %c0_86] : memref<8x128xf32, #tpu.memory_space<vmem>>, vector<8x128xf32>
    tpu.vector_store %arg13[%c0_85, %c0_86], %127 {strides = array<i32>} : memref<8x128xf32, #tpu.memory_space<vmem>>, vector<8x128xf32>,
    return
  }
  func.func @transform_0(%arg0: i32) -> (i32, i32) {
    %c0_i32 = arith.constant 0 : i32
    %c0_i32_0 = arith.constant 0 : i32
    return %arg0, %c0_i32 : i32, i32
  }
  func.func @transform_1(%arg0: i32) -> (i32, i32) {
    %c0_i32 = arith.constant 0 : i32
    %c0_i32_0 = arith.constant 0 : i32
    return %arg0, %c0_i32 : i32, i32
  }
  func.func @transform_2(%arg0: i32) -> (i32, i32) {
    %c0_i32 = arith.constant 0 : i32
    %c0_i32_0 = arith.constant 0 : i32
    %c0_i32_1 = arith.constant 0 : i32
    return %c0_i32, %c0_i32_0 : i32, i32
  }
  func.func @transform_3(%arg0: i32) -> (i32, i32) {
    %c0_i32 = arith.constant 0 : i32
    %c0_i32_0 = arith.constant 0 : i32
    %c0_i32_1 = arith.constant 0 : i32
    return %c0_i32, %c0_i32_0 : i32, i32
  }
  func.func @transform_4(%arg0: i32) -> (i32, i32) {
    %c0_i32 = arith.constant 0 : i32
    %c0_i32_0 = arith.constant 0 : i32
    %c0_i32_1 = arith.constant 0 : i32
    return %c0_i32, %c0_i32_0 : i32, i32
  }
  func.func @transform_5(%arg0: i32) -> (i32, i32) {
    %c0_i32 = arith.constant 0 : i32
    %c0_i32_0 = arith.constant 0 : i32
    %c0_i32_1 = arith.constant 0 : i32
    return %c0_i32, %c0_i32_0 : i32, i32
  }
  func.func @transform_6(%arg0: i32) -> (i32, i32, i32) {
    %c0_i32 = arith.constant 0 : i32
    %c0_i32_0 = arith.constant 0 : i32
    %c0_i32_1 = arith.constant 0 : i32
    %c0_i32_2 = arith.constant 0 : i32
    return %c0_i32, %c0_i32_0, %c0_i32_1 : i32, i32, i32
  }
  func.func @transform_7(%arg0: i32) -> (i32, i32, i32) {
    %c0_i32 = arith.constant 0 : i32
    %c0_i32_0 = arith.constant 0 : i32
    %c0_i32_1 = arith.constant 0 : i32
    %c0_i32_2 = arith.constant 0 : i32
    return %c0_i32, %c0_i32_0, %c0_i32_1 : i32, i32, i32
  }
  func.func @transform_8(%arg0: i32) -> (i32, i32, i32) {
    %c0_i32 = arith.constant 0 : i32
    %c0_i32_0 = arith.constant 0 : i32
    %c0_i32_1 = arith.constant 0 : i32
    %c0_i32_2 = arith.constant 0 : i32
    return %c0_i32, %c0_i32_0, %c0_i32_1 : i32, i32, i32
  }
  func.func @transform_9(%arg0: i32) -> (i32, i32, i32) {
    %c0_i32 = arith.constant 0 : i32
    %c0_i32_0 = arith.constant 0 : i32
    %c0_i32_1 = arith.constant 0 : i32
    %c0_i32_2 = arith.constant 0 : i32
    return %c0_i32, %c0_i32_0, %c0_i32_1 : i32, i32, i32
  }
  func.func @transform_10(%arg0: i32) -> (i32, i32) {
    %c0_i32 = arith.constant 0 : i32
    %c0_i32_0 = arith.constant 0 : i32
    %c0_i32_1 = arith.constant 0 : i32
    return %c0_i32, %c0_i32_0 : i32, i32
  }
  func.func @transform_11(%arg0: i32) -> (i32, i32) {
    %c0_i32 = arith.constant 0 : i32
    %c0_i32_0 = arith.constant 0 : i32
    %c0_i32_1 = arith.constant 0 : i32
    return %c0_i32, %c0_i32_0 : i32, i32
  }
  func.func @transform_12(%arg0: i32) -> (i32, i32) {
    %c0_i32 = arith.constant 0 : i32
    %c0_i32_0 = arith.constant 0 : i32
    return %arg0, %c0_i32 : i32, i32
  }
}

</mosaic_0001>

<llo_original>
// kernel: tpu_custom_call.1
$region0: #{tpu_custom_call.1}
  #allocation0 [shape = 'u32[]', space=smem, size = 0x4, offset = 0x4, fixed_abs, tag = 'smem constant byte address 0x4 - core index']
  #allocation1 [shape = 'u32[72,128]{1,0:T(1,128)}', space=vmem, size = 0x9000, scoped, tag = 'internal scratch']
  %s0 = inlined_call_operand.vmem [shape: s32[32,1], index: 0, kind: input, shape index: {}]
  %s1 = inlined_call_operand.vmem [shape: s32[32,1], index: 1, kind: input, shape index: {}]
  %s2 = inlined_call_operand.vmem [shape: f32[128,32], index: 2, kind: input, shape index: {}]
  %s3 = inlined_call_operand.vmem [shape: f32[128,32], index: 3, kind: input, shape index: {}]
  %s4 = inlined_call_operand.vmem [shape: f32[16,32], index: 4, kind: input, shape index: {}]
  %s5 = inlined_call_operand.vmem [shape: f32[16,32], index: 5, kind: input, shape index: {}]
  %s6 = inlined_call_operand.vmem [shape: bf16[4,32,384], index: 6, kind: input, shape index: {}]
  %s7 = inlined_call_operand.vmem [shape: f32[4,1,384], index: 7, kind: input, shape index: {}]
  %s8 = inlined_call_operand.vmem [shape: bf16[4,384,32], index: 8, kind: input, shape index: {}]
  %s9 = inlined_call_operand.vmem [shape: f32[4,1,32], index: 9, kind: input, shape index: {}]
  %s10 = inlined_call_operand.vmem [shape: bf16[128,128], index: 10, kind: input, shape index: {}]
  %s11 = inlined_call_operand.vmem [shape: f32[1,128], index: 11, kind: input, shape index: {}]
  %s12 = inlined_call_operand.hbm [shape: f32[32,128], index: 12, kind: output, shape index: {}]
  %s13 = sld [smem:[#allocation0]]
  $region81: #{tpu_custom_call.1} parent=0
    _
  %s15 = ssub.s32 1, %s13
  %s16 = scalar_select 0, %s15, %s13
  $region1: #{tpu_custom_call.1} parent=0
    #allocation2 [shape = 'u8[8192]{0}', space=vmem, size = 0x2000, scoped, tag = 'output window, operand 0']
    #allocation3 [shape = 's32[2]{0}', space=sflag, size = 0x8, scoped, tag = 'scoped memory for tpu_custom_call.1']
    %17 = vsyncpa [#allocation3], 0
    %s18 = scalar_lea.sflag [#allocation3], 1
    %19 = vsyncpa %s18, 0
    loop: start=0, step=1, limit=6
    $region2: #{tpu_custom_call.1} parent=1 // loop_pre_header
      _
    $region3: #{tpu_custom_call.1} parent=1 // loop_header
      %s21 = sphi 0, %s25
      %p22 = scmp.ge.s32.totalorder %s21, 6
      %s31 = sphi 0, %s33
      %s34 = sphi 0, %s31
      %s35 = sphi 0, %s34
      %s51 = sphi 0, %s35
      %s57 = sphi 0, %s59
      %s60 = sphi 0, %s57
      %s61 = sphi 0, %s60
      %s77 = sphi 0, %s61
      %s81 = sphi 0, %s81
      %s83 = sphi 0, %s81
      %s84 = sphi 0, %s83
      %s98 = sphi 0, %s84
      %s102 = sphi 0, %s102
      %s104 = sphi 0, %s102
      %s105 = sphi 0, %s104
      %s119 = sphi 0, %s105
      %s123 = sphi 0, %s123
      %s125 = sphi 0, %s123
      %s126 = sphi 0, %s125
      %s140 = sphi 0, %s126
      %s144 = sphi 0, %s144
      %s146 = sphi 0, %s144
      %s147 = sphi 0, %s146
      %s161 = sphi 0, %s147
      %s165 = sphi 0, %s165
      %s167 = sphi 0, %s165
      %s168 = sphi 0, %s167
      %s182 = sphi 0, %s168
      %s186 = sphi 0, %s186
      %s188 = sphi 0, %s186
      %s189 = sphi 0, %s188
      %s203 = sphi 0, %s189
      %s207 = sphi 0, %s207
      %s209 = sphi 0, %s207
      %s210 = sphi 0, %s209
      %s224 = sphi 0, %s210
      %s228 = sphi 0, %s228
      %s230 = sphi 0, %s228
      %s231 = sphi 0, %s230
      %s245 = sphi 0, %s231
      %s249 = sphi 0, %s249
      %s251 = sphi 0, %s249
      %s252 = sphi 0, %s251
      %s266 = sphi 0, %s252
      %s270 = sphi 0, %s270
      %s272 = sphi 0, %s270
      %s273 = sphi 0, %s272
      %s287 = sphi 0, %s273
      %s293 = sphi 0, %s295
      %s296 = sphi 0, %s293
      %s297 = sphi 0, %s296
      %s313 = sphi 0, %s297
    $region4: #{tpu_custom_call.1} parent=1 // loop_header_branch
      %24 = sbr.rel (%p22) target = $region8
    $region5: #{tpu_custom_call.1} parent=1 // loop_body
      %s26 = ssub.s32 %s21, 1
      %s27 = ssub.s32 %s21, 2
      %s28 = sadd.s32 %s21, 1
      %s29 = ssub.s32 %s21, %s28
      %p30 = scmp.eq.s32.totalorder %s29, 0
      %s32 = sadd.s32 %s31, 1
      %s33 = scalar_select %p30, %s31, %s32
      %p36 = pneg %p30
      %p37 = scmp.eq.s32.totalorder %s21, 3
      %p38 = por %p36, %p37
      %p39 = scmp.ne.s32.totalorder %s31, %s34
      %p40 = scmp.eq.s32.totalorder %s21, 0
      %p41 = por %p39, %p40
      %p42 = scmp.ne.s32.totalorder %s31, %s34
      %p43 = scmp.eq.s32.totalorder %s26, 3
      %p44 = por %p42, %p43
      %p45 = scmp.ne.s32.totalorder %s34, %s35
      %p46 = scmp.eq.s32.totalorder %s26, 0
      %p47 = por %p45, %p46
      %p48 = scmp.ne.s32.totalorder %s34, %s35
      %p49 = scmp.eq.s32.totalorder %s27, 3
      %p50 = por %p48, %p49
      %p52 = scmp.ne.s32.totalorder %s35, %s51
      %p53 = scmp.eq.s32.totalorder %s27, 0
      %p54 = por %p52, %p53
      %s55 = ssub.s32 %s21, %s28
      %p56 = scmp.eq.s32.totalorder %s55, 0
      %s58 = sadd.s32 %s57, 1
      %s59 = scalar_select %p56, %s57, %s58
      %p62 = pneg %p56
      %p63 = scmp.eq.s32.totalorder %s21, 3
      %p64 = por %p62, %p63
      %p65 = scmp.ne.s32.totalorder %s57, %s60
      %p66 = scmp.eq.s32.totalorder %s21, 0
      %p67 = por %p65, %p66
      %p68 = scmp.ne.s32.totalorder %s57, %s60
      %p69 = scmp.eq.s32.totalorder %s26, 3
      %p70 = por %p68, %p69
      %p71 = scmp.ne.s32.totalorder %s60, %s61
      %p72 = scmp.eq.s32.totalorder %s26, 0
      %p73 = por %p71, %p72
      %p74 = scmp.ne.s32.totalorder %s60, %s61
      %p75 = scmp.eq.s32.totalorder %s27, 3
      %p76 = por %p74, %p75
      %p78 = scmp.ne.s32.totalorder %s61, %s77
      %p79 = scmp.eq.s32.totalorder %s27, 0
      %p80 = por %p78, %p79
      %s82 = sadd.s32 %s81, 1
      %p85 = scmp.eq.s32.totalorder %s21, 3
      %p86 = scmp.ne.s32.totalorder %s81, %s83
      %p87 = scmp.eq.s32.totalorder %s21, 0
      %p88 = por %p86, %p87
      %p89 = scmp.ne.s32.totalorder %s81, %s83
      %p90 = scmp.eq.s32.totalorder %s26, 3
      %p91 = por %p89, %p90
      %p92 = scmp.ne.s32.totalorder %s83, %s84
      %p93 = scmp.eq.s32.totalorder %s26, 0
      %p94 = por %p92, %p93
      %p95 = scmp.ne.s32.totalorder %s83, %s84
      %p96 = scmp.eq.s32.totalorder %s27, 3
      %p97 = por %p95, %p96
      %p99 = scmp.ne.s32.totalorder %s84, %s98
      %p100 = scmp.eq.s32.totalorder %s27, 0
      %p101 = por %p99, %p100
      %s103 = sadd.s32 %s102, 1
      %p106 = scmp.eq.s32.totalorder %s21, 3
      %p107 = scmp.ne.s32.totalorder %s102, %s104
      %p108 = scmp.eq.s32.totalorder %s21, 0
      %p109 = por %p107, %p108
      %p110 = scmp.ne.s32.totalorder %s102, %s104
      %p111 = scmp.eq.s32.totalorder %s26, 3
      %p112 = por %p110, %p111
      %p113 = scmp.ne.s32.totalorder %s104, %s105
      %p114 = scmp.eq.s32.totalorder %s26, 0
      %p115 = por %p113, %p114
      %p116 = scmp.ne.s32.totalorder %s104, %s105
      %p117 = scmp.eq.s32.totalorder %s27, 3
      %p118 = por %p116, %p117
      %p120 = scmp.ne.s32.totalorder %s105, %s119
      %p121 = scmp.eq.s32.totalorder %s27, 0
      %p122 = por %p120, %p121
      %s124 = sadd.s32 %s123, 1
      %p127 = scmp.eq.s32.totalorder %s21, 3
      %p128 = scmp.ne.s32.totalorder %s123, %s125
      %p129 = scmp.eq.s32.totalorder %s21, 0
      %p130 = por %p128, %p129
      %p131 = scmp.ne.s32.totalorder %s123, %s125
      %p132 = scmp.eq.s32.totalorder %s26, 3
      %p133 = por %p131, %p132
      %p134 = scmp.ne.s32.totalorder %s125, %s126
      %p135 = scmp.eq.s32.totalorder %s26, 0
      %p136 = por %p134, %p135
      %p137 = scmp.ne.s32.totalorder %s125, %s126
      %p138 = scmp.eq.s32.totalorder %s27, 3
      %p139 = por %p137, %p138
      %p141 = scmp.ne.s32.totalorder %s126, %s140
      %p142 = scmp.eq.s32.totalorder %s27, 0
      %p143 = por %p141, %p142
      %s145 = sadd.s32 %s144, 1
      %p148 = scmp.eq.s32.totalorder %s21, 3
      %p149 = scmp.ne.s32.totalorder %s144, %s146
      %p150 = scmp.eq.s32.totalorder %s21, 0
      %p151 = por %p149, %p150
      %p152 = scmp.ne.s32.totalorder %s144, %s146
      %p153 = scmp.eq.s32.totalorder %s26, 3
      %p154 = por %p152, %p153
      %p155 = scmp.ne.s32.totalorder %s146, %s147
      %p156 = scmp.eq.s32.totalorder %s26, 0
      %p157 = por %p155, %p156
      %p158 = scmp.ne.s32.totalorder %s146, %s147
      %p159 = scmp.eq.s32.totalorder %s27, 3
      %p160 = por %p158, %p159
      %p162 = scmp.ne.s32.totalorder %s147, %s161
      %p163 = scmp.eq.s32.totalorder %s27, 0
      %p164 = por %p162, %p163
      %s166 = sadd.s32 %s165, 1
      %p169 = scmp.eq.s32.totalorder %s21, 3
      %p170 = scmp.ne.s32.totalorder %s165, %s167
      %p171 = scmp.eq.s32.totalorder %s21, 0
      %p172 = por %p170, %p171
      %p173 = scmp.ne.s32.totalorder %s165, %s167
      %p174 = scmp.eq.s32.totalorder %s26, 3
      %p175 = por %p173, %p174
      %p176 = scmp.ne.s32.totalorder %s167, %s168
      %p177 = scmp.eq.s32.totalorder %s26, 0
      %p178 = por %p176, %p177
      %p179 = scmp.ne.s32.totalorder %s167, %s168
      %p180 = scmp.eq.s32.totalorder %s27, 3
      %p181 = por %p179, %p180
      %p183 = scmp.ne.s32.totalorder %s168, %s182
      %p184 = scmp.eq.s32.totalorder %s27, 0
      %p185 = por %p183, %p184
      %s187 = sadd.s32 %s186, 1
      %p190 = scmp.eq.s32.totalorder %s21, 3
      %p191 = scmp.ne.s32.totalorder %s186, %s188
      %p192 = scmp.eq.s32.totalorder %s21, 0
      %p193 = por %p191, %p192
      %p194 = scmp.ne.s32.totalorder %s186, %s188
      %p195 = scmp.eq.s32.totalorder %s26, 3
      %p196 = por %p194, %p195
      %p197 = scmp.ne.s32.totalorder %s188, %s189
      %p198 = scmp.eq.s32.totalorder %s26, 0
      %p199 = por %p197, %p198
      %p200 = scmp.ne.s32.totalorder %s188, %s189
      %p201 = scmp.eq.s32.totalorder %s27, 3
      %p202 = por %p200, %p201
      %p204 = scmp.ne.s32.totalorder %s189, %s203
      %p205 = scmp.eq.s32.totalorder %s27, 0
      %p206 = por %p204, %p205
      %s208 = sadd.s32 %s207, 1
      %p211 = scmp.eq.s32.totalorder %s21, 3
      %p212 = scmp.ne.s32.totalorder %s207, %s209
      %p213 = scmp.eq.s32.totalorder %s21, 0
      %p214 = por %p212, %p213
      %p215 = scmp.ne.s32.totalorder %s207, %s209
      %p216 = scmp.eq.s32.totalorder %s26, 3
      %p217 = por %p215, %p216
      %p218 = scmp.ne.s32.totalorder %s209, %s210
      %p219 = scmp.eq.s32.totalorder %s26, 0
      %p220 = por %p218, %p219
      %p221 = scmp.ne.s32.totalorder %s209, %s210
      %p222 = scmp.eq.s32.totalorder %s27, 3
      %p223 = por %p221, %p222
      %p225 = scmp.ne.s32.totalorder %s210, %s224
      %p226 = scmp.eq.s32.totalorder %s27, 0
      %p227 = por %p225, %p226
      %s229 = sadd.s32 %s228, 1
      %p232 = scmp.eq.s32.totalorder %s21, 3
      %p233 = scmp.ne.s32.totalorder %s228, %s230
      %p234 = scmp.eq.s32.totalorder %s21, 0
      %p235 = por %p233, %p234
      %p236 = scmp.ne.s32.totalorder %s228, %s230
      %p237 = scmp.eq.s32.totalorder %s26, 3
      %p238 = por %p236, %p237
      %p239 = scmp.ne.s32.totalorder %s230, %s231
      %p240 = scmp.eq.s32.totalorder %s26, 0
      %p241 = por %p239, %p240
      %p242 = scmp.ne.s32.totalorder %s230, %s231
      %p243 = scmp.eq.s32.totalorder %s27, 3
      %p244 = por %p242, %p243
      %p246 = scmp.ne.s32.totalorder %s231, %s245
      %p247 = scmp.eq.s32.totalorder %s27, 0
      %p248 = por %p246, %p247
      %s250 = sadd.s32 %s249, 1
      %p253 = scmp.eq.s32.totalorder %s21, 3
      %p254 = scmp.ne.s32.totalorder %s249, %s251
      %p255 = scmp.eq.s32.totalorder %s21, 0
      %p256 = por %p254, %p255
      %p257 = scmp.ne.s32.totalorder %s249, %s251
      %p258 = scmp.eq.s32.totalorder %s26, 3
      %p259 = por %p257, %p258
      %p260 = scmp.ne.s32.totalorder %s251, %s252
      %p261 = scmp.eq.s32.totalorder %s26, 0
      %p262 = por %p260, %p261
      %p263 = scmp.ne.s32.totalorder %s251, %s252
      %p264 = scmp.eq.s32.totalorder %s27, 3
      %p265 = por %p263, %p264
      %p267 = scmp.ne.s32.totalorder %s252, %s266
      %p268 = scmp.eq.s32.totalorder %s27, 0
      %p269 = por %p267, %p268
      %s271 = sadd.s32 %s270, 1
      %p274 = scmp.eq.s32.totalorder %s21, 3
      %p275 = scmp.ne.s32.totalorder %s270, %s272
      %p276 = scmp.eq.s32.totalorder %s21, 0
      %p277 = por %p275, %p276
      %p278 = scmp.ne.s32.totalorder %s270, %s272
      %p279 = scmp.eq.s32.totalorder %s26, 3
      %p280 = por %p278, %p279
      %p281 = scmp.ne.s32.totalorder %s272, %s273
      %p282 = scmp.eq.s32.totalorder %s26, 0
      %p283 = por %p281, %p282
      %p284 = scmp.ne.s32.totalorder %s272, %s273
      %p285 = scmp.eq.s32.totalorder %s27, 3
      %p286 = por %p284, %p285
      %p288 = scmp.ne.s32.totalorder %s273, %s287
      %p289 = scmp.eq.s32.totalorder %s27, 0
      %p290 = por %p288, %p289
      %s291 = ssub.s32 %s21, %s28
      %p292 = scmp.eq.s32.totalorder %s291, 0
      %s294 = sadd.s32 %s293, 1
      %s295 = scalar_select %p292, %s293, %s294
      %p298 = pneg %p292
      %p299 = scmp.eq.s32.totalorder %s21, 3
      %p300 = por %p298, %p299
      %p301 = scmp.ne.s32.totalorder %s293, %s296
      %p302 = scmp.eq.s32.totalorder %s21, 0
      %p303 = por %p301, %p302
      %p304 = scmp.ne.s32.totalorder %s293, %s296
      %p305 = scmp.eq.s32.totalorder %s26, 3
      %p306 = por %p304, %p305
      %p307 = scmp.ne.s32.totalorder %s296, %s297
      %p308 = scmp.eq.s32.totalorder %s26, 0
      %p309 = por %p307, %p308
      %p310 = scmp.ne.s32.totalorder %s296, %s297
      %p311 = scmp.eq.s32.totalorder %s27, 3
      %p312 = por %p310, %p311
      %p314 = scmp.ne.s32.totalorder %s297, %s313
      %p315 = scmp.eq.s32.totalorder %s27, 0
      %p316 = por %p314, %p315
      %p317 = scmp.le.s32.totalorder 1, %s21
      %p318 = scmp.lt.s32.totalorder %s21, 5
      %p319 = pnand %p317, %p318
      %p320 = pneg %p319
      // Predicated region
      $region9: #{tpu_custom_call.1} parent=5 // pred_check
        _
      $region10: #{tpu_custom_call.1} parent=5 // pred_check_branch
        %322 = sbr.rel (%p319) target = $region12
      $region11: #{tpu_custom_call.1} parent=5 // pred_region
        %s323 = ssub.s32 %s21, 1
        // Predicated region
        $region13: #{tpu_custom_call.1} parent=11 // pred_check
          %p324 = pneg %p94
        $region14: #{tpu_custom_call.1} parent=11 // pred_check_branch
          %326 = sbr.rel (%p324) target = $region16
        $region15: #{tpu_custom_call.1} parent=11 // pred_region
          _
        $region16: #{tpu_custom_call.1} parent=11 // pred_fallthru
          _
        // Predicated region
        $region17: #{tpu_custom_call.1} parent=11 // pred_check
          %p327 = pneg %p115
        $region18: #{tpu_custom_call.1} parent=11 // pred_check_branch
          %329 = sbr.rel (%p327) target = $region20
        $region19: #{tpu_custom_call.1} parent=11 // pred_region
          _
        $region20: #{tpu_custom_call.1} parent=11 // pred_fallthru
          _
        // Predicated region
        $region21: #{tpu_custom_call.1} parent=11 // pred_check
          %p330 = pneg %p136
        $region22: #{tpu_custom_call.1} parent=11 // pred_check_branch
          %332 = sbr.rel (%p330) target = $region24
        $region23: #{tpu_custom_call.1} parent=11 // pred_region
          _
        $region24: #{tpu_custom_call.1} parent=11 // pred_fallthru
          _
        // Predicated region
        $region25: #{tpu_custom_call.1} parent=11 // pred_check
          %p333 = pneg %p157
        $region26: #{tpu_custom_call.1} parent=11 // pred_check_branch
          %335 = sbr.rel (%p333) target = $region28
        $region27: #{tpu_custom_call.1} parent=11 // pred_region
          _
        $region28: #{tpu_custom_call.1} parent=11 // pred_fallthru
          _
        // Predicated region
        $region29: #{tpu_custom_call.1} parent=11 // pred_check
          %p336 = pneg %p178
        $region30: #{tpu_custom_call.1} parent=11 // pred_check_branch
          %338 = sbr.rel (%p336) target = $region32
        $region31: #{tpu_custom_call.1} parent=11 // pred_region
          _
        $region32: #{tpu_custom_call.1} parent=11 // pred_fallthru
          _
        // Predicated region
        $region33: #{tpu_custom_call.1} parent=11 // pred_check
          %p339 = pneg %p199
        $region34: #{tpu_custom_call.1} parent=11 // pred_check_branch
          %341 = sbr.rel (%p339) target = $region36
        $region35: #{tpu_custom_call.1} parent=11 // pred_region
          _
        $region36: #{tpu_custom_call.1} parent=11 // pred_fallthru
          _
        // Predicated region
        $region37: #{tpu_custom_call.1} parent=11 // pred_check
          %p342 = pneg %p220
        $region38: #{tpu_custom_call.1} parent=11 // pred_check_branch
          %344 = sbr.rel (%p342) target = $region40
        $region39: #{tpu_custom_call.1} parent=11 // pred_region
          _
        $region40: #{tpu_custom_call.1} parent=11 // pred_fallthru
          _
        // Predicated region
        $region41: #{tpu_custom_call.1} parent=11 // pred_check
          %p345 = pneg %p241
        $region42: #{tpu_custom_call.1} parent=11 // pred_check_branch
          %347 = sbr.rel (%p345) target = $region44
        $region43: #{tpu_custom_call.1} parent=11 // pred_region
          _
        $region44: #{tpu_custom_call.1} parent=11 // pred_fallthru
          _
        // Predicated region
        $region45: #{tpu_custom_call.1} parent=11 // pred_check
          %p348 = pneg %p262
        $region46: #{tpu_custom_call.1} parent=11 // pred_check_branch
          %350 = sbr.rel (%p348) target = $region48
        $region47: #{tpu_custom_call.1} parent=11 // pred_region
          _
        $region48: #{tpu_custom_call.1} parent=11 // pred_fallthru
          _
        // Predicated region
        $region49: #{tpu_custom_call.1} parent=11 // pred_check
          %p351 = pneg %p283
        $region50: #{tpu_custom_call.1} parent=11 // pred_check_branch
          %353 = sbr.rel (%p351) target = $region52
        $region51: #{tpu_custom_call.1} parent=11 // pred_region
          _
        $region52: #{tpu_custom_call.1} parent=11 // pred_fallthru
          _
      $region12: #{tpu_custom_call.1} parent=5 // pred_fallthru
        _
      %p354 = scmp.lt.s32.totalorder %s21, 4
      // Predicated region
      $region53: #{tpu_custom_call.1} parent=5 // pred_check
        %p355 = pneg %p354
      $region54: #{tpu_custom_call.1} parent=5 // pred_check_branch
        %357 = sbr.rel (%p355) target = $region56
      $region55: #{tpu_custom_call.1} parent=5 // pred_region
        // Predicated region
        $region57: #{tpu_custom_call.1} parent=55 // pred_check
          %p358 = pneg %p41
        $region58: #{tpu_custom_call.1} parent=55 // pred_check_branch
          %360 = sbr.rel (%p358) target = $region60
        $region59: #{tpu_custom_call.1} parent=55 // pred_region
          %p361 = scmp.lt.s32.totalorder %s21, 3
          %s362 = scalar_select %p361, %s21, 3
          %s363 = smul.addr %s362, 8
          %s364 = scalar_lea.vmem %s0, %s363
        $region60: #{tpu_custom_call.1} parent=55 // pred_fallthru
          _
        // Predicated region
        $region61: #{tpu_custom_call.1} parent=55 // pred_check
          %p365 = pneg %p67
        $region62: #{tpu_custom_call.1} parent=55 // pred_check_branch
          %367 = sbr.rel (%p365) target = $region64
        $region63: #{tpu_custom_call.1} parent=55 // pred_region
          %p368 = scmp.lt.s32.totalorder %s21, 3
          %s369 = scalar_select %p368, %s21, 3
          %s370 = smul.addr %s369, 8
          %s371 = scalar_lea.vmem %s1, %s370
        $region64: #{tpu_custom_call.1} parent=55 // pred_fallthru
          _
      $region56: #{tpu_custom_call.1} parent=5 // pred_fallthru
        _
      %p372 = scmp.le.s32.totalorder 1, %s21
      %p373 = scmp.lt.s32.totalorder %s21, 5
      %p374 = pnand %p372, %p373
      %p375 = pneg %p374
      // Predicated region
      $region65: #{tpu_custom_call.1} parent=5 // pred_check
        _
      $region66: #{tpu_custom_call.1} parent=5 // pred_check_branch
        %377 = sbr.rel (%p374) target = $region68
      $region67: #{tpu_custom_call.1} parent=5 // pred_region
        %s378 = ssub.s32 %s21, 1
        %p379 = scmp.lt.s32.totalorder %s26, 3
        %s380 = scalar_select %p379, %s26, 3
        %s381 = smul.addr %s380, 8
        %s382 = scalar_lea.vmem %s0, %s381
        %p383 = pneg %p47
        %p384 = pneg %p44
        %p385 = scmp.lt.s32.totalorder %s26, 3
        %s386 = scalar_select %p385, %s26, 3
        %s387 = smul.addr %s386, 8
        %s388 = scalar_lea.vmem %s1, %s387
        %p389 = pneg %p73
        %p390 = pneg %p70
        %p391 = pneg %p94
        %p392 = pneg %p91
        %p393 = pneg %p115
        %p394 = pneg %p112
        %p395 = pneg %p136
        %p396 = pneg %p133
        %p397 = pneg %p157
        %p398 = pneg %p154
        %p399 = pneg %p178
        %p400 = pneg %p175
        %p401 = pneg %p199
        %p402 = pneg %p196
        %p403 = pneg %p220
        %p404 = pneg %p217
        %p405 = pneg %p241
        %p406 = pneg %p238
        %p407 = pneg %p262
        %p408 = pneg %p259
        %p409 = pneg %p283
        %p410 = pneg %p280
        %p411 = pneg %p309
        %p412 = pneg %p306
        %s413 = sand.u32 %s296, 1
        %s414 = scalar_lea.sflag [#allocation3], %s413
        %s415 = sand.u32 %s296, 1
        %s416 = smul.addr %s415, 8
        %s417 = scalar_lea.vmem [#allocation2], %s416
        %p418 = scmp.lt.s32.totalorder %s26, 3
        %s419 = scalar_select %p418, %s26, 3
        %s420 = smul.addr %s419, 8
        %s421 = scalar_lea.vmem %s0, %s420
        %p422 = scmp.lt.s32.totalorder %s26, 3
        %s423 = scalar_select %p422, %s26, 3
        %s424 = smul.addr %s423, 8
        %s425 = scalar_lea.vmem %s1, %s424
        %v426 = vld [vmem:[%s421] sm:$0xff]
        %v427 = vlaneseq
        %v428 = vand.u32 %v427, 127
        %429 = vset.pattern.permute.xlu0 0
        %430 = vperm.xlu0 %429, %v426
        %v431 = vpop.permute.xlu0 %430
        %vm432 = vcmp.eq.s32.totalorder %v431, %v428
        %v433 = vsel %vm432, 1, 0
        %v434 = vcvt.s32.f32 %v433
        %v435 = vld [vmem:[%s2] sm:$0xff]
        %v436 = vld [vmem:[%s2 + $0x8] sm:$0xff]
        %v437 = vld [vmem:[%s2 + $0x10] sm:$0xff]
        %v438 = vld [vmem:[%s2 + $0x18] sm:$0xff]
        %v439 = vld [vmem:[%s2 + $0x20] sm:$0xff]
        %v440 = vld [vmem:[%s2 + $0x28] sm:$0xff]
        %v441 = vld [vmem:[%s2 + $0x30] sm:$0xff]
        %v442 = vld [vmem:[%s2 + $0x38] sm:$0xff]
        %v443 = vld [vmem:[%s2 + $0x40] sm:$0xff]
        %v444 = vld [vmem:[%s2 + $0x48] sm:$0xff]
        %v445 = vld [vmem:[%s2 + $0x50] sm:$0xff]
        %v446 = vld [vmem:[%s2 + $0x58] sm:$0xff]
        %v447 = vld [vmem:[%s2 + $0x60] sm:$0xff]
        %v448 = vld [vmem:[%s2 + $0x68] sm:$0xff]
        %v449 = vld [vmem:[%s2 + $0x70] sm:$0xff]
        %v450 = vld [vmem:[%s2 + $0x78] sm:$0xff]
        %451 = vmatpush.msra.mxu0 %v450
        %452 = vmatpush.msra.mxu0 %v449
        %453 = vmatpush.msra.mxu0 %v448
        %454 = vmatpush.msra.mxu0 %v447
        %455 = vmatpush.msra.mxu0 %v446
        %456 = vmatpush.msra.mxu0 %v445
        %457 = vmatpush.msra.mxu0 %v444
        %458 = vmatpush.msra.mxu0 %v443
        %459 = vmatpush.msra.mxu0 %v442
        %460 = vmatpush.msra.mxu0 %v441
        %461 = vmatpush.msra.mxu0 %v440
        %462 = vmatpush.msra.mxu0 %v439
        %463 = vmatpush.msra.mxu0 %v438
        %464 = vmatpush.msra.mxu0 %v437
        %465 = vmatpush.msra.mxu0 %v436
        %466 = vmatpush.msra.mxu0 %v435
        %467 = vmatmul.f32.gmra.mxu0 %v434
        %v468 = vpop.f32.mrf.mxu0
        %v469 = vadd.f32 0.0, %v468
        %470 = vdwg.mxu0
        %v471 = vld [vmem:[%s3] sm:$0xff]
        %v472 = vld [vmem:[%s3 + $0x8] sm:$0xff]
        %v473 = vld [vmem:[%s3 + $0x10] sm:$0xff]
        %v474 = vld [vmem:[%s3 + $0x18] sm:$0xff]
        %v475 = vld [vmem:[%s3 + $0x20] sm:$0xff]
        %v476 = vld [vmem:[%s3 + $0x28] sm:$0xff]
        %v477 = vld [vmem:[%s3 + $0x30] sm:$0xff]
        %v478 = vld [vmem:[%s3 + $0x38] sm:$0xff]
        %v479 = vld [vmem:[%s3 + $0x40] sm:$0xff]
        %v480 = vld [vmem:[%s3 + $0x48] sm:$0xff]
        %v481 = vld [vmem:[%s3 + $0x50] sm:$0xff]
        %v482 = vld [vmem:[%s3 + $0x58] sm:$0xff]
        %v483 = vld [vmem:[%s3 + $0x60] sm:$0xff]
        %v484 = vld [vmem:[%s3 + $0x68] sm:$0xff]
        %v485 = vld [vmem:[%s3 + $0x70] sm:$0xff]
        %v486 = vld [vmem:[%s3 + $0x78] sm:$0xff]
        %487 = vmatpush.msra.mxu0 %v486
        %488 = vmatpush.msra.mxu0 %v485
        %489 = vmatpush.msra.mxu0 %v484
        %490 = vmatpush.msra.mxu0 %v483
        %491 = vmatpush.msra.mxu0 %v482
        %492 = vmatpush.msra.mxu0 %v481
        %493 = vmatpush.msra.mxu0 %v480
        %494 = vmatpush.msra.mxu0 %v479
        %495 = vmatpush.msra.mxu0 %v478
        %496 = vmatpush.msra.mxu0 %v477
        %497 = vmatpush.msra.mxu0 %v476
        %498 = vmatpush.msra.mxu0 %v475
        %499 = vmatpush.msra.mxu0 %v474
        %500 = vmatpush.msra.mxu0 %v473
        %501 = vmatpush.msra.mxu0 %v472
        %502 = vmatpush.msra.mxu0 %v471
        %503 = vmatmul.f32.gmra.mxu0 %v434
        %v504 = vpop.f32.mrf.mxu0
        %v505 = vadd.f32 0.0, %v504
        %506 = vdwg.mxu0
        %v507 = vld [vmem:[%s425] sm:$0xff]
        %508 = vset.pattern.permute.xlu0 0
        %509 = vperm.xlu0 %508, %v507
        %v510 = vpop.permute.xlu0 %509
        %vm511 = vcmp.eq.s32.totalorder %v510, %v428
        %v512 = vsel %vm511, 1, 0
        %v513 = vcvt.s32.f32 %v512
        %v514 = vld [vmem:[%s4] sm:$0xff]
        %v515 = vld [vmem:[%s4 + $0x8] sm:$0xff]
        %vm516 = vcmask 130048
        %v518 = vsel %vm516, %v513, 0
        %520 = vmatpush.msra.mxu0 0.0
        %521 = vmatpush.msra.mxu0 0.0
        %522 = vmatpush.msra.mxu0 0.0
        %523 = vmatpush.msra.mxu0 0.0
        %524 = vmatpush.msra.mxu0 0.0
        %525 = vmatpush.msra.mxu0 0.0
        %526 = vmatpush.msra.mxu0 0.0
        %527 = vmatpush.msra.mxu0 0.0
        %528 = vmatpush.msra.mxu0 0.0
        %529 = vmatpush.msra.mxu0 0.0
        %530 = vmatpush.msra.mxu0 0.0
        %531 = vmatpush.msra.mxu0 0.0
        %532 = vmatpush.msra.mxu0 0.0
        %533 = vmatpush.msra.mxu0 0.0
        %534 = vmatpush.msra.mxu0 %v515
        %535 = vmatpush.msra.mxu0 %v514
        %536 = vmatmul.f32.gmra.mxu0 %v518
        %v537 = vpop.f32.mrf.mxu0
        %v538 = vadd.f32 0.0, %v537
        %539 = vdwg.mxu0
        %v540 = vld [vmem:[%s5] sm:$0xff]
        %v541 = vld [vmem:[%s5 + $0x8] sm:$0xff]
        %542 = vmatpush.msra.mxu0 0.0
        %543 = vmatpush.msra.mxu0 0.0
        %544 = vmatpush.msra.mxu0 0.0
        %545 = vmatpush.msra.mxu0 0.0
        %546 = vmatpush.msra.mxu0 0.0
        %547 = vmatpush.msra.mxu0 0.0
        %548 = vmatpush.msra.mxu0 0.0
        %549 = vmatpush.msra.mxu0 0.0
        %550 = vmatpush.msra.mxu0 0.0
        %551 = vmatpush.msra.mxu0 0.0
        %552 = vmatpush.msra.mxu0 0.0
        %553 = vmatpush.msra.mxu0 0.0
        %554 = vmatpush.msra.mxu0 0.0
        %555 = vmatpush.msra.mxu0 0.0
        %556 = vmatpush.msra.mxu0 %v541
        %557 = vmatpush.msra.mxu0 %v540
        %558 = vmatmul.f32.gmra.mxu0 %v518
        %v559 = vpop.f32.mrf.mxu0
        %v560 = vadd.f32 0.0, %v559
        %561 = vdwg.mxu0
        %v562 = vld [vmem:[%s6] sm:$0xff]
        %v563 = vld [vmem:[%s6 + $0x8] sm:$0xf]
        %v564 = vld [vmem:[%s6 + $0xc] sm:$0xff]
        %v565 = vld [vmem:[%s6 + $0x14] sm:$0xf]
        %v566 = vld [vmem:[%s6 + $0x18] sm:$0xff]
        %v567 = vld [vmem:[%s6 + $0x20] sm:$0xf]
        %v568 = vld [vmem:[%s6 + $0x24] sm:$0xff]
        %v569 = vld [vmem:[%s6 + $0x2c] sm:$0xf]
        %v570 = vunpack.c.l.bf16 %v562
        %v571 = vunpack.c.h.bf16 %v562
        %v572 = vunpack.c.l.bf16 %v563
        %v573 = vunpack.c.l.bf16 %v564
        %v574 = vunpack.c.h.bf16 %v564
        %v575 = vunpack.c.l.bf16 %v565
        %v576 = vunpack.c.l.bf16 %v566
        %v577 = vunpack.c.h.bf16 %v566
        %v578 = vunpack.c.l.bf16 %v567
        %v579 = vunpack.c.l.bf16 %v568
        %v580 = vunpack.c.h.bf16 %v568
        %v581 = vunpack.c.l.bf16 %v569
        %v582 = vld [vmem:[%s8] sm:$0xf]
        %v583 = vld [vmem:[%s8 + $0x4] sm:$0xf]
        %v584 = vld [vmem:[%s8 + $0x8] sm:$0xf]
        %v585 = vld [vmem:[%s8 + $0xc] sm:$0xf]
        %v586 = vld [vmem:[%s8 + $0x10] sm:$0xf]
        %v587 = vld [vmem:[%s8 + $0x14] sm:$0xf]
        %v588 = vld [vmem:[%s8 + $0x18] sm:$0xf]
        %v589 = vld [vmem:[%s8 + $0x1c] sm:$0xf]
        %v590 = vld [vmem:[%s8 + $0x20] sm:$0xf]
        %v591 = vld [vmem:[%s8 + $0x24] sm:$0xf]
        %v592 = vld [vmem:[%s8 + $0x28] sm:$0xf]
        %v593 = vld [vmem:[%s8 + $0x2c] sm:$0xf]
        %v594 = vld [vmem:[%s8 + $0x30] sm:$0xf]
        %v595 = vld [vmem:[%s8 + $0x34] sm:$0xf]
        %v596 = vld [vmem:[%s8 + $0x38] sm:$0xf]
        %v597 = vld [vmem:[%s8 + $0x3c] sm:$0xf]
        %v598 = vld [vmem:[%s8 + $0x40] sm:$0xf]
        %v599 = vld [vmem:[%s8 + $0x44] sm:$0xf]
        %v600 = vld [vmem:[%s8 + $0x48] sm:$0xf]
        %v601 = vld [vmem:[%s8 + $0x4c] sm:$0xf]
        %v602 = vld [vmem:[%s8 + $0x50] sm:$0xf]
        %v603 = vld [vmem:[%s8 + $0x54] sm:$0xf]
        %v604 = vld [vmem:[%s8 + $0x58] sm:$0xf]
        %v605 = vld [vmem:[%s8 + $0x5c] sm:$0xf]
        %v606 = vld [vmem:[%s8 + $0x60] sm:$0xf]
        %v607 = vld [vmem:[%s8 + $0x64] sm:$0xf]
        %v608 = vld [vmem:[%s8 + $0x68] sm:$0xf]
        %v609 = vld [vmem:[%s8 + $0x6c] sm:$0xf]
        %v610 = vld [vmem:[%s8 + $0x70] sm:$0xf]
        %v611 = vld [vmem:[%s8 + $0x74] sm:$0xf]
        %v612 = vld [vmem:[%s8 + $0x78] sm:$0xf]
        %v613 = vld [vmem:[%s8 + $0x7c] sm:$0xf]
        %v614 = vld [vmem:[%s8 + $0x80] sm:$0xf]
        %v615 = vld [vmem:[%s8 + $0x84] sm:$0xf]
        %v616 = vld [vmem:[%s8 + $0x88] sm:$0xf]
        %v617 = vld [vmem:[%s8 + $0x8c] sm:$0xf]
        %v618 = vld [vmem:[%s8 + $0x90] sm:$0xf]
        %v619 = vld [vmem:[%s8 + $0x94] sm:$0xf]
        %v620 = vld [vmem:[%s8 + $0x98] sm:$0xf]
        %v621 = vld [vmem:[%s8 + $0x9c] sm:$0xf]
        %v622 = vld [vmem:[%s8 + $0xa0] sm:$0xf]
        %v623 = vld [vmem:[%s8 + $0xa4] sm:$0xf]
        %v624 = vld [vmem:[%s8 + $0xa8] sm:$0xf]
        %v625 = vld [vmem:[%s8 + $0xac] sm:$0xf]
        %v626 = vld [vmem:[%s8 + $0xb0] sm:$0xf]
        %v627 = vld [vmem:[%s8 + $0xb4] sm:$0xf]
        %v628 = vld [vmem:[%s8 + $0xb8] sm:$0xf]
        %v629 = vld [vmem:[%s8 + $0xbc] sm:$0xf]
        %v630 = vunpack.c.l.bf16 %v582
        %v631 = vunpack.c.l.bf16 %v583
        %v632 = vunpack.c.l.bf16 %v584
        %v633 = vunpack.c.l.bf16 %v585
        %v634 = vunpack.c.l.bf16 %v586
        %v635 = vunpack.c.l.bf16 %v587
        %v636 = vunpack.c.l.bf16 %v588
        %v637 = vunpack.c.l.bf16 %v589
        %v638 = vunpack.c.l.bf16 %v590
        %v639 = vunpack.c.l.bf16 %v591
        %v640 = vunpack.c.l.bf16 %v592
        %v641 = vunpack.c.l.bf16 %v593
        %v642 = vunpack.c.l.bf16 %v594
        %v643 = vunpack.c.l.bf16 %v595
        %v644 = vunpack.c.l.bf16 %v596
        %v645 = vunpack.c.l.bf16 %v597
        %v646 = vunpack.c.l.bf16 %v598
        %v647 = vunpack.c.l.bf16 %v599
        %v648 = vunpack.c.l.bf16 %v600
        %v649 = vunpack.c.l.bf16 %v601
        %v650 = vunpack.c.l.bf16 %v602
        %v651 = vunpack.c.l.bf16 %v603
        %v652 = vunpack.c.l.bf16 %v604
        %v653 = vunpack.c.l.bf16 %v605
        %v654 = vunpack.c.l.bf16 %v606
        %v655 = vunpack.c.l.bf16 %v607
        %v656 = vunpack.c.l.bf16 %v608
        %v657 = vunpack.c.l.bf16 %v609
        %v658 = vunpack.c.l.bf16 %v610
        %v659 = vunpack.c.l.bf16 %v611
        %v660 = vunpack.c.l.bf16 %v612
        %v661 = vunpack.c.l.bf16 %v613
        %v662 = vunpack.c.l.bf16 %v614
        %v663 = vunpack.c.l.bf16 %v615
        %v664 = vunpack.c.l.bf16 %v616
        %v665 = vunpack.c.l.bf16 %v617
        %v666 = vunpack.c.l.bf16 %v618
        %v667 = vunpack.c.l.bf16 %v619
        %v668 = vunpack.c.l.bf16 %v620
        %v669 = vunpack.c.l.bf16 %v621
        %v670 = vunpack.c.l.bf16 %v622
        %v671 = vunpack.c.l.bf16 %v623
        %v672 = vunpack.c.l.bf16 %v624
        %v673 = vunpack.c.l.bf16 %v625
        %v674 = vunpack.c.l.bf16 %v626
        %v675 = vunpack.c.l.bf16 %v627
        %v676 = vunpack.c.l.bf16 %v628
        %v677 = vunpack.c.l.bf16 %v629
        %v678 = vld [vmem:[%s7] sm:$0x7]
        %v680 = vperm.slane %v678, 0
        %v681 = vperm.slane %v678, 1
        %v682 = vperm.slane %v678, 2
        %vm686 = vcmask 261120
        %v688 = vsel %vm686, %v469, 0
        %690 = vmatpush.msra.mxu0 0.0
        %691 = vmatpush.msra.mxu0 0.0
        %692 = vmatpush.msra.mxu0 0.0
        %693 = vmatpush.msra.mxu0 0.0
        %694 = vmatpush.msra.mxu0 0.0
        %695 = vmatpush.msra.mxu0 0.0
        %696 = vmatpush.msra.mxu0 0.0
        %697 = vmatpush.msra.mxu0 0.0
        %698 = vmatpush.msra.mxu0 0.0
        %699 = vmatpush.msra.mxu0 0.0
        %700 = vmatpush.msra.mxu0 0.0
        %701 = vmatpush.msra.mxu0 0.0
        %702 = vmatpush.msra.mxu0 %v579
        %703 = vmatpush.msra.mxu0 %v576
        %704 = vmatpush.msra.mxu0 %v573
        %705 = vmatpush.msra.mxu0 %v570
        %706 = vmatmul.f32.gmra.mxu0 %v688
        %v707 = vpop.f32.mrf.mxu0
        %v708 = vadd.f32 %v680, %v707
        %709 = vdwg.mxu0
        %710 = vmatpush.msra.mxu0 0.0
        %711 = vmatpush.msra.mxu0 0.0
        %712 = vmatpush.msra.mxu0 0.0
        %713 = vmatpush.msra.mxu0 0.0
        %714 = vmatpush.msra.mxu0 0.0
        %715 = vmatpush.msra.mxu0 0.0
        %716 = vmatpush.msra.mxu0 0.0
        %717 = vmatpush.msra.mxu0 0.0
        %718 = vmatpush.msra.mxu0 0.0
        %719 = vmatpush.msra.mxu0 0.0
        %720 = vmatpush.msra.mxu0 0.0
        %721 = vmatpush.msra.mxu0 0.0
        %722 = vmatpush.msra.mxu0 %v580
        %723 = vmatpush.msra.mxu0 %v577
        %724 = vmatpush.msra.mxu0 %v574
        %725 = vmatpush.msra.mxu0 %v571
        %726 = vmatmul.f32.gmra.mxu0 %v688
        %v727 = vpop.f32.mrf.mxu0
        %v728 = vadd.f32 %v681, %v727
        %729 = vdwg.mxu0
        %730 = vmatpush.msra.mxu0 0.0
        %731 = vmatpush.msra.mxu0 0.0
        %732 = vmatpush.msra.mxu0 0.0
        %733 = vmatpush.msra.mxu0 0.0
        %734 = vmatpush.msra.mxu0 0.0
        %735 = vmatpush.msra.mxu0 0.0
        %736 = vmatpush.msra.mxu0 0.0
        %737 = vmatpush.msra.mxu0 0.0
        %738 = vmatpush.msra.mxu0 0.0
        %739 = vmatpush.msra.mxu0 0.0
        %740 = vmatpush.msra.mxu0 0.0
        %741 = vmatpush.msra.mxu0 0.0
        %742 = vmatpush.msra.mxu0 %v581
        %743 = vmatpush.msra.mxu0 %v578
        %744 = vmatpush.msra.mxu0 %v575
        %745 = vmatpush.msra.mxu0 %v572
        %746 = vmatmul.f32.gmra.mxu0 %v688
        %v747 = vpop.f32.mrf.mxu0
        %v748 = vadd.f32 %v682, %v747
        %749 = vdwg.mxu0
        %v750 = vmax.f32 %v708, 0.0
        %v751 = vmax.f32 %v728, 0.0
        %v752 = vmax.f32 %v748, 0.0
        %v753 = vld [vmem:[%s9] sm:$0x1]
        %v755 = vperm.slane %v753, 0
        %757 = vmatpush.msra.mxu0 %v645
        %758 = vmatpush.msra.mxu0 %v644
        %759 = vmatpush.msra.mxu0 %v643
        %760 = vmatpush.msra.mxu0 %v642
        %761 = vmatpush.msra.mxu0 %v641
        %762 = vmatpush.msra.mxu0 %v640
        %763 = vmatpush.msra.mxu0 %v639
        %764 = vmatpush.msra.mxu0 %v638
        %765 = vmatpush.msra.mxu0 %v637
        %766 = vmatpush.msra.mxu0 %v636
        %767 = vmatpush.msra.mxu0 %v635
        %768 = vmatpush.msra.mxu0 %v634
        %769 = vmatpush.msra.mxu0 %v633
        %770 = vmatpush.msra.mxu0 %v632
        %771 = vmatpush.msra.mxu0 %v631
        %772 = vmatpush.msra.mxu0 %v630
        %773 = vmatmul.f32.gmra.mxu0 %v750
        %v774 = vpop.f32.mrf.mxu0
        %v775 = vadd.f32 %v755, %v774
        %776 = vdwg.mxu0
        %777 = vmatpush.msra.mxu0 %v661
        %778 = vmatpush.msra.mxu0 %v660
        %779 = vmatpush.msra.mxu0 %v659
        %780 = vmatpush.msra.mxu0 %v658
        %781 = vmatpush.msra.mxu0 %v657
        %782 = vmatpush.msra.mxu0 %v656
        %783 = vmatpush.msra.mxu0 %v655
        %784 = vmatpush.msra.mxu0 %v654
        %785 = vmatpush.msra.mxu0 %v653
        %786 = vmatpush.msra.mxu0 %v652
        %787 = vmatpush.msra.mxu0 %v651
        %788 = vmatpush.msra.mxu0 %v650
        %789 = vmatpush.msra.mxu0 %v649
        %790 = vmatpush.msra.mxu0 %v648
        %791 = vmatpush.msra.mxu0 %v647
        %792 = vmatpush.msra.mxu0 %v646
        %793 = vmatmul.f32.gmra.mxu0 %v751
        %v794 = vpop.f32.mrf.mxu0
        %v795 = vadd.f32 %v775, %v794
        %796 = vdwg.mxu0
        %797 = vmatpush.msra.mxu0 %v677
        %798 = vmatpush.msra.mxu0 %v676
        %799 = vmatpush.msra.mxu0 %v675
        %800 = vmatpush.msra.mxu0 %v674
        %801 = vmatpush.msra.mxu0 %v673
        %802 = vmatpush.msra.mxu0 %v672
        %803 = vmatpush.msra.mxu0 %v671
        %804 = vmatpush.msra.mxu0 %v670
        %805 = vmatpush.msra.mxu0 %v669
        %806 = vmatpush.msra.mxu0 %v668
        %807 = vmatpush.msra.mxu0 %v667
        %808 = vmatpush.msra.mxu0 %v666
        %809 = vmatpush.msra.mxu0 %v665
        %810 = vmatpush.msra.mxu0 %v664
        %811 = vmatpush.msra.mxu0 %v663
        %812 = vmatpush.msra.mxu0 %v662
        %813 = vmatmul.f32.gmra.mxu0 %v752
        %v814 = vpop.f32.mrf.mxu0
        %v815 = vadd.f32 %v795, %v814
        %816 = vdwg.mxu0
        %v817 = vmax.f32 %v815, 0.0
        %s818 = scalar_lea.vmem %s6, 48
        %v819 = vld [vmem:[%s818] sm:$0xff]
        %v820 = vld [vmem:[%s818 + $0x8] sm:$0xf]
        %v821 = vld [vmem:[%s818 + $0xc] sm:$0xff]
        %v822 = vld [vmem:[%s818 + $0x14] sm:$0xf]
        %v823 = vld [vmem:[%s818 + $0x18] sm:$0xff]
        %v824 = vld [vmem:[%s818 + $0x20] sm:$0xf]
        %v825 = vld [vmem:[%s818 + $0x24] sm:$0xff]
        %v826 = vld [vmem:[%s818 + $0x2c] sm:$0xf]
        %v827 = vunpack.c.l.bf16 %v819
        %v828 = vunpack.c.h.bf16 %v819
        %v829 = vunpack.c.l.bf16 %v820
        %v830 = vunpack.c.l.bf16 %v821
        %v831 = vunpack.c.h.bf16 %v821
        %v832 = vunpack.c.l.bf16 %v822
        %v833 = vunpack.c.l.bf16 %v823
        %v834 = vunpack.c.h.bf16 %v823
        %v835 = vunpack.c.l.bf16 %v824
        %v836 = vunpack.c.l.bf16 %v825
        %v837 = vunpack.c.h.bf16 %v825
        %v838 = vunpack.c.l.bf16 %v826
        %s839 = scalar_lea.vmem %s8, 192
        %v840 = vld [vmem:[%s839] sm:$0xf]
        %v841 = vld [vmem:[%s839 + $0x4] sm:$0xf]
        %v842 = vld [vmem:[%s839 + $0x8] sm:$0xf]
        %v843 = vld [vmem:[%s839 + $0xc] sm:$0xf]
        %v844 = vld [vmem:[%s839 + $0x10] sm:$0xf]
        %v845 = vld [vmem:[%s839 + $0x14] sm:$0xf]
        %v846 = vld [vmem:[%s839 + $0x18] sm:$0xf]
        %v847 = vld [vmem:[%s839 + $0x1c] sm:$0xf]
        %v848 = vld [vmem:[%s839 + $0x20] sm:$0xf]
        %v849 = vld [vmem:[%s839 + $0x24] sm:$0xf]
        %v850 = vld [vmem:[%s839 + $0x28] sm:$0xf]
        %v851 = vld [vmem:[%s839 + $0x2c] sm:$0xf]
        %v852 = vld [vmem:[%s839 + $0x30] sm:$0xf]
        %v853 = vld [vmem:[%s839 + $0x34] sm:$0xf]
        %v854 = vld [vmem:[%s839 + $0x38] sm:$0xf]
        %v855 = vld [vmem:[%s839 + $0x3c] sm:$0xf]
        %v856 = vld [vmem:[%s839 + $0x40] sm:$0xf]
        %v857 = vld [vmem:[%s839 + $0x44] sm:$0xf]
        %v858 = vld [vmem:[%s839 + $0x48] sm:$0xf]
        %v859 = vld [vmem:[%s839 + $0x4c] sm:$0xf]
        %v860 = vld [vmem:[%s839 + $0x50] sm:$0xf]
        %v861 = vld [vmem:[%s839 + $0x54] sm:$0xf]
        %v862 = vld [vmem:[%s839 + $0x58] sm:$0xf]
        %v863 = vld [vmem:[%s839 + $0x5c] sm:$0xf]
        %v864 = vld [vmem:[%s839 + $0x60] sm:$0xf]
        %v865 = vld [vmem:[%s839 + $0x64] sm:$0xf]
        %v866 = vld [vmem:[%s839 + $0x68] sm:$0xf]
        %v867 = vld [vmem:[%s839 + $0x6c] sm:$0xf]
        %v868 = vld [vmem:[%s839 + $0x70] sm:$0xf]
        %v869 = vld [vmem:[%s839 + $0x74] sm:$0xf]
        %v870 = vld [vmem:[%s839 + $0x78] sm:$0xf]
        %v871 = vld [vmem:[%s839 + $0x7c] sm:$0xf]
        %v872 = vld [vmem:[%s839 + $0x80] sm:$0xf]
        %v873 = vld [vmem:[%s839 + $0x84] sm:$0xf]
        %v874 = vld [vmem:[%s839 + $0x88] sm:$0xf]
        %v875 = vld [vmem:[%s839 + $0x8c] sm:$0xf]
        %v876 = vld [vmem:[%s839 + $0x90] sm:$0xf]
        %v877 = vld [vmem:[%s839 + $0x94] sm:$0xf]
        %v878 = vld [vmem:[%s839 + $0x98] sm:$0xf]
        %v879 = vld [vmem:[%s839 + $0x9c] sm:$0xf]
        %v880 = vld [vmem:[%s839 + $0xa0] sm:$0xf]
        %v881 = vld [vmem:[%s839 + $0xa4] sm:$0xf]
        %v882 = vld [vmem:[%s839 + $0xa8] sm:$0xf]
        %v883 = vld [vmem:[%s839 + $0xac] sm:$0xf]
        %v884 = vld [vmem:[%s839 + $0xb0] sm:$0xf]
        %v885 = vld [vmem:[%s839 + $0xb4] sm:$0xf]
        %v886 = vld [vmem:[%s839 + $0xb8] sm:$0xf]
        %v887 = vld [vmem:[%s839 + $0xbc] sm:$0xf]
        %v888 = vunpack.c.l.bf16 %v840
        %v889 = vunpack.c.l.bf16 %v841
        %v890 = vunpack.c.l.bf16 %v842
        %v891 = vunpack.c.l.bf16 %v843
        %v892 = vunpack.c.l.bf16 %v844
        %v893 = vunpack.c.l.bf16 %v845
        %v894 = vunpack.c.l.bf16 %v846
        %v895 = vunpack.c.l.bf16 %v847
        %v896 = vunpack.c.l.bf16 %v848
        %v897 = vunpack.c.l.bf16 %v849
        %v898 = vunpack.c.l.bf16 %v850
        %v899 = vunpack.c.l.bf16 %v851
        %v900 = vunpack.c.l.bf16 %v852
        %v901 = vunpack.c.l.bf16 %v853
        %v902 = vunpack.c.l.bf16 %v854
        %v903 = vunpack.c.l.bf16 %v855
        %v904 = vunpack.c.l.bf16 %v856
        %v905 = vunpack.c.l.bf16 %v857
        %v906 = vunpack.c.l.bf16 %v858
        %v907 = vunpack.c.l.bf16 %v859
        %v908 = vunpack.c.l.bf16 %v860
        %v909 = vunpack.c.l.bf16 %v861
        %v910 = vunpack.c.l.bf16 %v862
        %v911 = vunpack.c.l.bf16 %v863
        %v912 = vunpack.c.l.bf16 %v864
        %v913 = vunpack.c.l.bf16 %v865
        %v914 = vunpack.c.l.bf16 %v866
        %v915 = vunpack.c.l.bf16 %v867
        %v916 = vunpack.c.l.bf16 %v868
        %v917 = vunpack.c.l.bf16 %v869
        %v918 = vunpack.c.l.bf16 %v870
        %v919 = vunpack.c.l.bf16 %v871
        %v920 = vunpack.c.l.bf16 %v872
        %v921 = vunpack.c.l.bf16 %v873
        %v922 = vunpack.c.l.bf16 %v874
        %v923 = vunpack.c.l.bf16 %v875
        %v924 = vunpack.c.l.bf16 %v876
        %v925 = vunpack.c.l.bf16 %v877
        %v926 = vunpack.c.l.bf16 %v878
        %v927 = vunpack.c.l.bf16 %v879
        %v928 = vunpack.c.l.bf16 %v880
        %v929 = vunpack.c.l.bf16 %v881
        %v930 = vunpack.c.l.bf16 %v882
        %v931 = vunpack.c.l.bf16 %v883
        %v932 = vunpack.c.l.bf16 %v884
        %v933 = vunpack.c.l.bf16 %v885
        %v934 = vunpack.c.l.bf16 %v886
        %v935 = vunpack.c.l.bf16 %v887
        %s936 = scalar_lea.vmem %s7, 3
        %v937 = vld [vmem:[%s936] sm:$0x7]
        %v939 = vperm.slane %v937, 0
        %v940 = vperm.slane %v937, 1
        %v941 = vperm.slane %v937, 2
        %v946 = vsel %vm686, %v505, 0
        %948 = vmatpush.msra.mxu0 0.0
        %949 = vmatpush.msra.mxu0 0.0
        %950 = vmatpush.msra.mxu0 0.0
        %951 = vmatpush.msra.mxu0 0.0
        %952 = vmatpush.msra.mxu0 0.0
        %953 = vmatpush.msra.mxu0 0.0
        %954 = vmatpush.msra.mxu0 0.0
        %955 = vmatpush.msra.mxu0 0.0
        %956 = vmatpush.msra.mxu0 0.0
        %957 = vmatpush.msra.mxu0 0.0
        %958 = vmatpush.msra.mxu0 0.0
        %959 = vmatpush.msra.mxu0 0.0
        %960 = vmatpush.msra.mxu0 %v836
        %961 = vmatpush.msra.mxu0 %v833
        %962 = vmatpush.msra.mxu0 %v830
        %963 = vmatpush.msra.mxu0 %v827
        %964 = vmatmul.f32.gmra.mxu0 %v946
        %v965 = vpop.f32.mrf.mxu0
        %v966 = vadd.f32 %v939, %v965
        %967 = vdwg.mxu0
        %968 = vmatpush.msra.mxu0 0.0
        %969 = vmatpush.msra.mxu0 0.0
        %970 = vmatpush.msra.mxu0 0.0
        %971 = vmatpush.msra.mxu0 0.0
        %972 = vmatpush.msra.mxu0 0.0
        %973 = vmatpush.msra.mxu0 0.0
        %974 = vmatpush.msra.mxu0 0.0
        %975 = vmatpush.msra.mxu0 0.0
        %976 = vmatpush.msra.mxu0 0.0
        %977 = vmatpush.msra.mxu0 0.0
        %978 = vmatpush.msra.mxu0 0.0
        %979 = vmatpush.msra.mxu0 0.0
        %980 = vmatpush.msra.mxu0 %v837
        %981 = vmatpush.msra.mxu0 %v834
        %982 = vmatpush.msra.mxu0 %v831
        %983 = vmatpush.msra.mxu0 %v828
        %984 = vmatmul.f32.gmra.mxu0 %v946
        %v985 = vpop.f32.mrf.mxu0
        %v986 = vadd.f32 %v940, %v985
        %987 = vdwg.mxu0
        %988 = vmatpush.msra.mxu0 0.0
        %989 = vmatpush.msra.mxu0 0.0
        %990 = vmatpush.msra.mxu0 0.0
        %991 = vmatpush.msra.mxu0 0.0
        %992 = vmatpush.msra.mxu0 0.0
        %993 = vmatpush.msra.mxu0 0.0
        %994 = vmatpush.msra.mxu0 0.0
        %995 = vmatpush.msra.mxu0 0.0
        %996 = vmatpush.msra.mxu0 0.0
        %997 = vmatpush.msra.mxu0 0.0
        %998 = vmatpush.msra.mxu0 0.0
        %999 = vmatpush.msra.mxu0 0.0
        %1000 = vmatpush.msra.mxu0 %v838
        %1001 = vmatpush.msra.mxu0 %v835
        %1002 = vmatpush.msra.mxu0 %v832
        %1003 = vmatpush.msra.mxu0 %v829
        %1004 = vmatmul.f32.gmra.mxu0 %v946
        %v1005 = vpop.f32.mrf.mxu0
        %v1006 = vadd.f32 %v941, %v1005
        %1007 = vdwg.mxu0
        %v1008 = vmax.f32 %v966, 0.0
        %v1009 = vmax.f32 %v986, 0.0
        %v1010 = vmax.f32 %v1006, 0.0
        %s1011 = scalar_lea.vmem %s9, 1
        %v1012 = vld [vmem:[%s1011] sm:$0x1]
        %v1014 = vperm.slane %v1012, 0
        %1016 = vmatpush.msra.mxu0 %v903
        %1017 = vmatpush.msra.mxu0 %v902
        %1018 = vmatpush.msra.mxu0 %v901
        %1019 = vmatpush.msra.mxu0 %v900
        %1020 = vmatpush.msra.mxu0 %v899
        %1021 = vmatpush.msra.mxu0 %v898
        %1022 = vmatpush.msra.mxu0 %v897
        %1023 = vmatpush.msra.mxu0 %v896
        %1024 = vmatpush.msra.mxu0 %v895
        %1025 = vmatpush.msra.mxu0 %v894
        %1026 = vmatpush.msra.mxu0 %v893
        %1027 = vmatpush.msra.mxu0 %v892
        %1028 = vmatpush.msra.mxu0 %v891
        %1029 = vmatpush.msra.mxu0 %v890
        %1030 = vmatpush.msra.mxu0 %v889
        %1031 = vmatpush.msra.mxu0 %v888
        %1032 = vmatmul.f32.gmra.mxu0 %v1008
        %v1033 = vpop.f32.mrf.mxu0
        %v1034 = vadd.f32 %v1014, %v1033
        %1035 = vdwg.mxu0
        %1036 = vmatpush.msra.mxu0 %v919
        %1037 = vmatpush.msra.mxu0 %v918
        %1038 = vmatpush.msra.mxu0 %v917
        %1039 = vmatpush.msra.mxu0 %v916
        %1040 = vmatpush.msra.mxu0 %v915
        %1041 = vmatpush.msra.mxu0 %v914
        %1042 = vmatpush.msra.mxu0 %v913
        %1043 = vmatpush.msra.mxu0 %v912
        %1044 = vmatpush.msra.mxu0 %v911
        %1045 = vmatpush.msra.mxu0 %v910
        %1046 = vmatpush.msra.mxu0 %v909
        %1047 = vmatpush.msra.mxu0 %v908
        %1048 = vmatpush.msra.mxu0 %v907
        %1049 = vmatpush.msra.mxu0 %v906
        %1050 = vmatpush.msra.mxu0 %v905
        %1051 = vmatpush.msra.mxu0 %v904
        %1052 = vmatmul.f32.gmra.mxu0 %v1009
        %v1053 = vpop.f32.mrf.mxu0
        %v1054 = vadd.f32 %v1034, %v1053
        %1055 = vdwg.mxu0
        %1056 = vmatpush.msra.mxu0 %v935
        %1057 = vmatpush.msra.mxu0 %v934
        %1058 = vmatpush.msra.mxu0 %v933
        %1059 = vmatpush.msra.mxu0 %v932
        %1060 = vmatpush.msra.mxu0 %v931
        %1061 = vmatpush.msra.mxu0 %v930
        %1062 = vmatpush.msra.mxu0 %v929
        %1063 = vmatpush.msra.mxu0 %v928
        %1064 = vmatpush.msra.mxu0 %v927
        %1065 = vmatpush.msra.mxu0 %v926
        %1066 = vmatpush.msra.mxu0 %v925
        %1067 = vmatpush.msra.mxu0 %v924
        %1068 = vmatpush.msra.mxu0 %v923
        %1069 = vmatpush.msra.mxu0 %v922
        %1070 = vmatpush.msra.mxu0 %v921
        %1071 = vmatpush.msra.mxu0 %v920
        %1072 = vmatmul.f32.gmra.mxu0 %v1010
        %v1073 = vpop.f32.mrf.mxu0
        %v1074 = vadd.f32 %v1054, %v1073
        %1075 = vdwg.mxu0
        %v1076 = vmax.f32 %v1074, 0.0
        %s1077 = scalar_lea.vmem %s6, 96
        %v1078 = vld [vmem:[%s1077] sm:$0xff]
        %v1079 = vld [vmem:[%s1077 + $0x8] sm:$0xf]
        %v1080 = vld [vmem:[%s1077 + $0xc] sm:$0xff]
        %v1081 = vld [vmem:[%s1077 + $0x14] sm:$0xf]
        %v1082 = vld [vmem:[%s1077 + $0x18] sm:$0xff]
        %v1083 = vld [vmem:[%s1077 + $0x20] sm:$0xf]
        %v1084 = vld [vmem:[%s1077 + $0x24] sm:$0xff]
        %v1085 = vld [vmem:[%s1077 + $0x2c] sm:$0xf]
        %v1086 = vunpack.c.l.bf16 %v1078
        %v1087 = vunpack.c.h.bf16 %v1078
        %v1088 = vunpack.c.l.bf16 %v1079
        %v1089 = vunpack.c.l.bf16 %v1080
        %v1090 = vunpack.c.h.bf16 %v1080
        %v1091 = vunpack.c.l.bf16 %v1081
        %v1092 = vunpack.c.l.bf16 %v1082
        %v1093 = vunpack.c.h.bf16 %v1082
        %v1094 = vunpack.c.l.bf16 %v1083
        %v1095 = vunpack.c.l.bf16 %v1084
        %v1096 = vunpack.c.h.bf16 %v1084
        %v1097 = vunpack.c.l.bf16 %v1085
        %s1098 = scalar_lea.vmem %s8, 384
        %v1099 = vld [vmem:[%s1098] sm:$0xf]
        %v1100 = vld [vmem:[%s1098 + $0x4] sm:$0xf]
        %v1101 = vld [vmem:[%s1098 + $0x8] sm:$0xf]
        %v1102 = vld [vmem:[%s1098 + $0xc] sm:$0xf]
        %v1103 = vld [vmem:[%s1098 + $0x10] sm:$0xf]
        %v1104 = vld [vmem:[%s1098 + $0x14] sm:$0xf]
        %v1105 = vld [vmem:[%s1098 + $0x18] sm:$0xf]
        %v1106 = vld [vmem:[%s1098 + $0x1c] sm:$0xf]
        %v1107 = vld [vmem:[%s1098 + $0x20] sm:$0xf]
        %v1108 = vld [vmem:[%s1098 + $0x24] sm:$0xf]
        %v1109 = vld [vmem:[%s1098 + $0x28] sm:$0xf]
        %v1110 = vld [vmem:[%s1098 + $0x2c] sm:$0xf]
        %v1111 = vld [vmem:[%s1098 + $0x30] sm:$0xf]
        %v1112 = vld [vmem:[%s1098 + $0x34] sm:$0xf]
        %v1113 = vld [vmem:[%s1098 + $0x38] sm:$0xf]
        %v1114 = vld [vmem:[%s1098 + $0x3c] sm:$0xf]
        %v1115 = vld [vmem:[%s1098 + $0x40] sm:$0xf]
        %v1116 = vld [vmem:[%s1098 + $0x44] sm:$0xf]
        %v1117 = vld [vmem:[%s1098 + $0x48] sm:$0xf]
        %v1118 = vld [vmem:[%s1098 + $0x4c] sm:$0xf]
        %v1119 = vld [vmem:[%s1098 + $0x50] sm:$0xf]
        %v1120 = vld [vmem:[%s1098 + $0x54] sm:$0xf]
        %v1121 = vld [vmem:[%s1098 + $0x58] sm:$0xf]
        %v1122 = vld [vmem:[%s1098 + $0x5c] sm:$0xf]
        %v1123 = vld [vmem:[%s1098 + $0x60] sm:$0xf]
        %v1124 = vld [vmem:[%s1098 + $0x64] sm:$0xf]
        %v1125 = vld [vmem:[%s1098 + $0x68] sm:$0xf]
        %v1126 = vld [vmem:[%s1098 + $0x6c] sm:$0xf]
        %v1127 = vld [vmem:[%s1098 + $0x70] sm:$0xf]
        %v1128 = vld [vmem:[%s1098 + $0x74] sm:$0xf]
        %v1129 = vld [vmem:[%s1098 + $0x78] sm:$0xf]
        %v1130 = vld [vmem:[%s1098 + $0x7c] sm:$0xf]
        %v1131 = vld [vmem:[%s1098 + $0x80] sm:$0xf]
        %v1132 = vld [vmem:[%s1098 + $0x84] sm:$0xf]
        %v1133 = vld [vmem:[%s1098 + $0x88] sm:$0xf]
        %v1134 = vld [vmem:[%s1098 + $0x8c] sm:$0xf]
        %v1135 = vld [vmem:[%s1098 + $0x90] sm:$0xf]
        %v1136 = vld [vmem:[%s1098 + $0x94] sm:$0xf]
        %v1137 = vld [vmem:[%s1098 + $0x98] sm:$0xf]
        %v1138 = vld [vmem:[%s1098 + $0x9c] sm:$0xf]
        %v1139 = vld [vmem:[%s1098 + $0xa0] sm:$0xf]
        %v1140 = vld [vmem:[%s1098 + $0xa4] sm:$0xf]
        %v1141 = vld [vmem:[%s1098 + $0xa8] sm:$0xf]
        %v1142 = vld [vmem:[%s1098 + $0xac] sm:$0xf]
        %v1143 = vld [vmem:[%s1098 + $0xb0] sm:$0xf]
        %v1144 = vld [vmem:[%s1098 + $0xb4] sm:$0xf]
        %v1145 = vld [vmem:[%s1098 + $0xb8] sm:$0xf]
        %v1146 = vld [vmem:[%s1098 + $0xbc] sm:$0xf]
        %v1147 = vunpack.c.l.bf16 %v1099
        %v1148 = vunpack.c.l.bf16 %v1100
        %v1149 = vunpack.c.l.bf16 %v1101
        %v1150 = vunpack.c.l.bf16 %v1102
        %v1151 = vunpack.c.l.bf16 %v1103
        %v1152 = vunpack.c.l.bf16 %v1104
        %v1153 = vunpack.c.l.bf16 %v1105
        %v1154 = vunpack.c.l.bf16 %v1106
        %v1155 = vunpack.c.l.bf16 %v1107
        %v1156 = vunpack.c.l.bf16 %v1108
        %v1157 = vunpack.c.l.bf16 %v1109
        %v1158 = vunpack.c.l.bf16 %v1110
        %v1159 = vunpack.c.l.bf16 %v1111
        %v1160 = vunpack.c.l.bf16 %v1112
        %v1161 = vunpack.c.l.bf16 %v1113
        %v1162 = vunpack.c.l.bf16 %v1114
        %v1163 = vunpack.c.l.bf16 %v1115
        %v1164 = vunpack.c.l.bf16 %v1116
        %v1165 = vunpack.c.l.bf16 %v1117
        %v1166 = vunpack.c.l.bf16 %v1118
        %v1167 = vunpack.c.l.bf16 %v1119
        %v1168 = vunpack.c.l.bf16 %v1120
        %v1169 = vunpack.c.l.bf16 %v1121
        %v1170 = vunpack.c.l.bf16 %v1122
        %v1171 = vunpack.c.l.bf16 %v1123
        %v1172 = vunpack.c.l.bf16 %v1124
        %v1173 = vunpack.c.l.bf16 %v1125
        %v1174 = vunpack.c.l.bf16 %v1126
        %v1175 = vunpack.c.l.bf16 %v1127
        %v1176 = vunpack.c.l.bf16 %v1128
        %v1177 = vunpack.c.l.bf16 %v1129
        %v1178 = vunpack.c.l.bf16 %v1130
        %v1179 = vunpack.c.l.bf16 %v1131
        %v1180 = vunpack.c.l.bf16 %v1132
        %v1181 = vunpack.c.l.bf16 %v1133
        %v1182 = vunpack.c.l.bf16 %v1134
        %v1183 = vunpack.c.l.bf16 %v1135
        %v1184 = vunpack.c.l.bf16 %v1136
        %v1185 = vunpack.c.l.bf16 %v1137
        %v1186 = vunpack.c.l.bf16 %v1138
        %v1187 = vunpack.c.l.bf16 %v1139
        %v1188 = vunpack.c.l.bf16 %v1140
        %v1189 = vunpack.c.l.bf16 %v1141
        %v1190 = vunpack.c.l.bf16 %v1142
        %v1191 = vunpack.c.l.bf16 %v1143
        %v1192 = vunpack.c.l.bf16 %v1144
        %v1193 = vunpack.c.l.bf16 %v1145
        %v1194 = vunpack.c.l.bf16 %v1146
        %s1195 = scalar_lea.vmem %s7, 6
        %v1196 = vld [vmem:[%s1195] sm:$0x7]
        %v1198 = vperm.slane %v1196, 0
        %v1199 = vperm.slane %v1196, 1
        %v1200 = vperm.slane %v1196, 2
        %v1205 = vsel %vm686, %v538, 0
        %1207 = vmatpush.msra.mxu0 0.0
        %1208 = vmatpush.msra.mxu0 0.0
        %1209 = vmatpush.msra.mxu0 0.0
        %1210 = vmatpush.msra.mxu0 0.0
        %1211 = vmatpush.msra.mxu0 0.0
        %1212 = vmatpush.msra.mxu0 0.0
        %1213 = vmatpush.msra.mxu0 0.0
        %1214 = vmatpush.msra.mxu0 0.0
        %1215 = vmatpush.msra.mxu0 0.0
        %1216 = vmatpush.msra.mxu0 0.0
        %1217 = vmatpush.msra.mxu0 0.0
        %1218 = vmatpush.msra.mxu0 0.0
        %1219 = vmatpush.msra.mxu0 %v1095
        %1220 = vmatpush.msra.mxu0 %v1092
        %1221 = vmatpush.msra.mxu0 %v1089
        %1222 = vmatpush.msra.mxu0 %v1086
        %1223 = vmatmul.f32.gmra.mxu0 %v1205
        %v1224 = vpop.f32.mrf.mxu0
        %v1225 = vadd.f32 %v1198, %v1224
        %1226 = vdwg.mxu0
        %1227 = vmatpush.msra.mxu0 0.0
        %1228 = vmatpush.msra.mxu0 0.0
        %1229 = vmatpush.msra.mxu0 0.0
        %1230 = vmatpush.msra.mxu0 0.0
        %1231 = vmatpush.msra.mxu0 0.0
        %1232 = vmatpush.msra.mxu0 0.0
        %1233 = vmatpush.msra.mxu0 0.0
        %1234 = vmatpush.msra.mxu0 0.0
        %1235 = vmatpush.msra.mxu0 0.0
        %1236 = vmatpush.msra.mxu0 0.0
        %1237 = vmatpush.msra.mxu0 0.0
        %1238 = vmatpush.msra.mxu0 0.0
        %1239 = vmatpush.msra.mxu0 %v1096
        %1240 = vmatpush.msra.mxu0 %v1093
        %1241 = vmatpush.msra.mxu0 %v1090
        %1242 = vmatpush.msra.mxu0 %v1087
        %1243 = vmatmul.f32.gmra.mxu0 %v1205
        %v1244 = vpop.f32.mrf.mxu0
        %v1245 = vadd.f32 %v1199, %v1244
        %1246 = vdwg.mxu0
        %1247 = vmatpush.msra.mxu0 0.0
        %1248 = vmatpush.msra.mxu0 0.0
        %1249 = vmatpush.msra.mxu0 0.0
        %1250 = vmatpush.msra.mxu0 0.0
        %1251 = vmatpush.msra.mxu0 0.0
        %1252 = vmatpush.msra.mxu0 0.0
        %1253 = vmatpush.msra.mxu0 0.0
        %1254 = vmatpush.msra.mxu0 0.0
        %1255 = vmatpush.msra.mxu0 0.0
        %1256 = vmatpush.msra.mxu0 0.0
        %1257 = vmatpush.msra.mxu0 0.0
        %1258 = vmatpush.msra.mxu0 0.0
        %1259 = vmatpush.msra.mxu0 %v1097
        %1260 = vmatpush.msra.mxu0 %v1094
        %1261 = vmatpush.msra.mxu0 %v1091
        %1262 = vmatpush.msra.mxu0 %v1088
        %1263 = vmatmul.f32.gmra.mxu0 %v1205
        %v1264 = vpop.f32.mrf.mxu0
        %v1265 = vadd.f32 %v1200, %v1264
        %1266 = vdwg.mxu0
        %v1267 = vmax.f32 %v1225, 0.0
        %v1268 = vmax.f32 %v1245, 0.0
        %v1269 = vmax.f32 %v1265, 0.0
        %s1270 = scalar_lea.vmem %s9, 2
        %v1271 = vld [vmem:[%s1270] sm:$0x1]
        %v1273 = vperm.slane %v1271, 0
        %1275 = vmatpush.msra.mxu0 %v1162
        %1276 = vmatpush.msra.mxu0 %v1161
        %1277 = vmatpush.msra.mxu0 %v1160
        %1278 = vmatpush.msra.mxu0 %v1159
        %1279 = vmatpush.msra.mxu0 %v1158
        %1280 = vmatpush.msra.mxu0 %v1157
        %1281 = vmatpush.msra.mxu0 %v1156
        %1282 = vmatpush.msra.mxu0 %v1155
        %1283 = vmatpush.msra.mxu0 %v1154
        %1284 = vmatpush.msra.mxu0 %v1153
        %1285 = vmatpush.msra.mxu0 %v1152
        %1286 = vmatpush.msra.mxu0 %v1151
        %1287 = vmatpush.msra.mxu0 %v1150
        %1288 = vmatpush.msra.mxu0 %v1149
        %1289 = vmatpush.msra.mxu0 %v1148
        %1290 = vmatpush.msra.mxu0 %v1147
        %1291 = vmatmul.f32.gmra.mxu0 %v1267
        %v1292 = vpop.f32.mrf.mxu0
        %v1293 = vadd.f32 %v1273, %v1292
        %1294 = vdwg.mxu0
        %1295 = vmatpush.msra.mxu0 %v1178
        %1296 = vmatpush.msra.mxu0 %v1177
        %1297 = vmatpush.msra.mxu0 %v1176
        %1298 = vmatpush.msra.mxu0 %v1175
        %1299 = vmatpush.msra.mxu0 %v1174
        %1300 = vmatpush.msra.mxu0 %v1173
        %1301 = vmatpush.msra.mxu0 %v1172
        %1302 = vmatpush.msra.mxu0 %v1171
        %1303 = vmatpush.msra.mxu0 %v1170
        %1304 = vmatpush.msra.mxu0 %v1169
        %1305 = vmatpush.msra.mxu0 %v1168
        %1306 = vmatpush.msra.mxu0 %v1167
        %1307 = vmatpush.msra.mxu0 %v1166
        %1308 = vmatpush.msra.mxu0 %v1165
        %1309 = vmatpush.msra.mxu0 %v1164
        %1310 = vmatpush.msra.mxu0 %v1163
        %1311 = vmatmul.f32.gmra.mxu0 %v1268
        %v1312 = vpop.f32.mrf.mxu0
        %v1313 = vadd.f32 %v1293, %v1312
        %1314 = vdwg.mxu0
        %1315 = vmatpush.msra.mxu0 %v1194
        %1316 = vmatpush.msra.mxu0 %v1193
        %1317 = vmatpush.msra.mxu0 %v1192
        %1318 = vmatpush.msra.mxu0 %v1191
        %1319 = vmatpush.msra.mxu0 %v1190
        %1320 = vmatpush.msra.mxu0 %v1189
        %1321 = vmatpush.msra.mxu0 %v1188
        %1322 = vmatpush.msra.mxu0 %v1187
        %1323 = vmatpush.msra.mxu0 %v1186
        %1324 = vmatpush.msra.mxu0 %v1185
        %1325 = vmatpush.msra.mxu0 %v1184
        %1326 = vmatpush.msra.mxu0 %v1183
        %1327 = vmatpush.msra.mxu0 %v1182
        %1328 = vmatpush.msra.mxu0 %v1181
        %1329 = vmatpush.msra.mxu0 %v1180
        %1330 = vmatpush.msra.mxu0 %v1179
        %1331 = vmatmul.f32.gmra.mxu0 %v1269
        %v1332 = vpop.f32.mrf.mxu0
        %v1333 = vadd.f32 %v1313, %v1332
        %1334 = vdwg.mxu0
        %v1335 = vmax.f32 %v1333, 0.0
        %s1336 = scalar_lea.vmem %s6, 144
        %v1337 = vld [vmem:[%s1336] sm:$0xff]
        %v1338 = vld [vmem:[%s1336 + $0x8] sm:$0xf]
        %v1339 = vld [vmem:[%s1336 + $0xc] sm:$0xff]
        %v1340 = vld [vmem:[%s1336 + $0x14] sm:$0xf]
        %v1341 = vld [vmem:[%s1336 + $0x18] sm:$0xff]
        %v1342 = vld [vmem:[%s1336 + $0x20] sm:$0xf]
        %v1343 = vld [vmem:[%s1336 + $0x24] sm:$0xff]
        %v1344 = vld [vmem:[%s1336 + $0x2c] sm:$0xf]
        %v1345 = vunpack.c.l.bf16 %v1337
        %v1346 = vunpack.c.h.bf16 %v1337
        %v1347 = vunpack.c.l.bf16 %v1338
        %v1348 = vunpack.c.l.bf16 %v1339
        %v1349 = vunpack.c.h.bf16 %v1339
        %v1350 = vunpack.c.l.bf16 %v1340
        %v1351 = vunpack.c.l.bf16 %v1341
        %v1352 = vunpack.c.h.bf16 %v1341
        %v1353 = vunpack.c.l.bf16 %v1342
        %v1354 = vunpack.c.l.bf16 %v1343
        %v1355 = vunpack.c.h.bf16 %v1343
        %v1356 = vunpack.c.l.bf16 %v1344
        %s1357 = scalar_lea.vmem %s8, 576
        %v1358 = vld [vmem:[%s1357] sm:$0xf]
        %v1359 = vld [vmem:[%s1357 + $0x4] sm:$0xf]
        %v1360 = vld [vmem:[%s1357 + $0x8] sm:$0xf]
        %v1361 = vld [vmem:[%s1357 + $0xc] sm:$0xf]
        %v1362 = vld [vmem:[%s1357 + $0x10] sm:$0xf]
        %v1363 = vld [vmem:[%s1357 + $0x14] sm:$0xf]
        %v1364 = vld [vmem:[%s1357 + $0x18] sm:$0xf]
        %v1365 = vld [vmem:[%s1357 + $0x1c] sm:$0xf]
        %v1366 = vld [vmem:[%s1357 + $0x20] sm:$0xf]
        %v1367 = vld [vmem:[%s1357 + $0x24] sm:$0xf]
        %v1368 = vld [vmem:[%s1357 + $0x28] sm:$0xf]
        %v1369 = vld [vmem:[%s1357 + $0x2c] sm:$0xf]
        %v1370 = vld [vmem:[%s1357 + $0x30] sm:$0xf]
        %v1371 = vld [vmem:[%s1357 + $0x34] sm:$0xf]
        %v1372 = vld [vmem:[%s1357 + $0x38] sm:$0xf]
        %v1373 = vld [vmem:[%s1357 + $0x3c] sm:$0xf]
        %v1374 = vld [vmem:[%s1357 + $0x40] sm:$0xf]
        %v1375 = vld [vmem:[%s1357 + $0x44] sm:$0xf]
        %v1376 = vld [vmem:[%s1357 + $0x48] sm:$0xf]
        %v1377 = vld [vmem:[%s1357 + $0x4c] sm:$0xf]
        %v1378 = vld [vmem:[%s1357 + $0x50] sm:$0xf]
        %v1379 = vld [vmem:[%s1357 + $0x54] sm:$0xf]
        %v1380 = vld [vmem:[%s1357 + $0x58] sm:$0xf]
        %v1381 = vld [vmem:[%s1357 + $0x5c] sm:$0xf]
        %v1382 = vld [vmem:[%s1357 + $0x60] sm:$0xf]
        %v1383 = vld [vmem:[%s1357 + $0x64] sm:$0xf]
        %v1384 = vld [vmem:[%s1357 + $0x68] sm:$0xf]
        %v1385 = vld [vmem:[%s1357 + $0x6c] sm:$0xf]
        %v1386 = vld [vmem:[%s1357 + $0x70] sm:$0xf]
        %v1387 = vld [vmem:[%s1357 + $0x74] sm:$0xf]
        %v1388 = vld [vmem:[%s1357 + $0x78] sm:$0xf]
        %v1389 = vld [vmem:[%s1357 + $0x7c] sm:$0xf]
        %v1390 = vld [vmem:[%s1357 + $0x80] sm:$0xf]
        %v1391 = vld [vmem:[%s1357 + $0x84] sm:$0xf]
        %v1392 = vld [vmem:[%s1357 + $0x88] sm:$0xf]
        %v1393 = vld [vmem:[%s1357 + $0x8c] sm:$0xf]
        %v1394 = vld [vmem:[%s1357 + $0x90] sm:$0xf]
        %v1395 = vld [vmem:[%s1357 + $0x94] sm:$0xf]
        %v1396 = vld [vmem:[%s1357 + $0x98] sm:$0xf]
        %v1397 = vld [vmem:[%s1357 + $0x9c] sm:$0xf]
        %v1398 = vld [vmem:[%s1357 + $0xa0] sm:$0xf]
        %v1399 = vld [vmem:[%s1357 + $0xa4] sm:$0xf]
        %v1400 = vld [vmem:[%s1357 + $0xa8] sm:$0xf]
        %v1401 = vld [vmem:[%s1357 + $0xac] sm:$0xf]
        %v1402 = vld [vmem:[%s1357 + $0xb0] sm:$0xf]
        %v1403 = vld [vmem:[%s1357 + $0xb4] sm:$0xf]
        %v1404 = vld [vmem:[%s1357 + $0xb8] sm:$0xf]
        %v1405 = vld [vmem:[%s1357 + $0xbc] sm:$0xf]
        %v1406 = vunpack.c.l.bf16 %v1358
        %v1407 = vunpack.c.l.bf16 %v1359
        %v1408 = vunpack.c.l.bf16 %v1360
        %v1409 = vunpack.c.l.bf16 %v1361
        %v1410 = vunpack.c.l.bf16 %v1362
        %v1411 = vunpack.c.l.bf16 %v1363
        %v1412 = vunpack.c.l.bf16 %v1364
        %v1413 = vunpack.c.l.bf16 %v1365
        %v1414 = vunpack.c.l.bf16 %v1366
        %v1415 = vunpack.c.l.bf16 %v1367
        %v1416 = vunpack.c.l.bf16 %v1368
        %v1417 = vunpack.c.l.bf16 %v1369
        %v1418 = vunpack.c.l.bf16 %v1370
        %v1419 = vunpack.c.l.bf16 %v1371
        %v1420 = vunpack.c.l.bf16 %v1372
        %v1421 = vunpack.c.l.bf16 %v1373
        %v1422 = vunpack.c.l.bf16 %v1374
        %v1423 = vunpack.c.l.bf16 %v1375
        %v1424 = vunpack.c.l.bf16 %v1376
        %v1425 = vunpack.c.l.bf16 %v1377
        %v1426 = vunpack.c.l.bf16 %v1378
        %v1427 = vunpack.c.l.bf16 %v1379
        %v1428 = vunpack.c.l.bf16 %v1380
        %v1429 = vunpack.c.l.bf16 %v1381
        %v1430 = vunpack.c.l.bf16 %v1382
        %v1431 = vunpack.c.l.bf16 %v1383
        %v1432 = vunpack.c.l.bf16 %v1384
        %v1433 = vunpack.c.l.bf16 %v1385
        %v1434 = vunpack.c.l.bf16 %v1386
        %v1435 = vunpack.c.l.bf16 %v1387
        %v1436 = vunpack.c.l.bf16 %v1388
        %v1437 = vunpack.c.l.bf16 %v1389
        %v1438 = vunpack.c.l.bf16 %v1390
        %v1439 = vunpack.c.l.bf16 %v1391
        %v1440 = vunpack.c.l.bf16 %v1392
        %v1441 = vunpack.c.l.bf16 %v1393
        %v1442 = vunpack.c.l.bf16 %v1394
        %v1443 = vunpack.c.l.bf16 %v1395
        %v1444 = vunpack.c.l.bf16 %v1396
        %v1445 = vunpack.c.l.bf16 %v1397
        %v1446 = vunpack.c.l.bf16 %v1398
        %v1447 = vunpack.c.l.bf16 %v1399
        %v1448 = vunpack.c.l.bf16 %v1400
        %v1449 = vunpack.c.l.bf16 %v1401
        %v1450 = vunpack.c.l.bf16 %v1402
        %v1451 = vunpack.c.l.bf16 %v1403
        %v1452 = vunpack.c.l.bf16 %v1404
        %v1453 = vunpack.c.l.bf16 %v1405
        %s1454 = scalar_lea.vmem %s7, 9
        %v1455 = vld [vmem:[%s1454] sm:$0x7]
        %v1457 = vperm.slane %v1455, 0
        %v1458 = vperm.slane %v1455, 1
        %v1459 = vperm.slane %v1455, 2
        %v1464 = vsel %vm686, %v560, 0
        %1466 = vmatpush.msra.mxu0 0.0
        %1467 = vmatpush.msra.mxu0 0.0
        %1468 = vmatpush.msra.mxu0 0.0
        %1469 = vmatpush.msra.mxu0 0.0
        %1470 = vmatpush.msra.mxu0 0.0
        %1471 = vmatpush.msra.mxu0 0.0
        %1472 = vmatpush.msra.mxu0 0.0
        %1473 = vmatpush.msra.mxu0 0.0
        %1474 = vmatpush.msra.mxu0 0.0
        %1475 = vmatpush.msra.mxu0 0.0
        %1476 = vmatpush.msra.mxu0 0.0
        %1477 = vmatpush.msra.mxu0 0.0
        %1478 = vmatpush.msra.mxu0 %v1354
        %1479 = vmatpush.msra.mxu0 %v1351
        %1480 = vmatpush.msra.mxu0 %v1348
        %1481 = vmatpush.msra.mxu0 %v1345
        %1482 = vmatmul.f32.gmra.mxu0 %v1464
        %v1483 = vpop.f32.mrf.mxu0
        %v1484 = vadd.f32 %v1457, %v1483
        %1485 = vdwg.mxu0
        %1486 = vmatpush.msra.mxu0 0.0
        %1487 = vmatpush.msra.mxu0 0.0
        %1488 = vmatpush.msra.mxu0 0.0
        %1489 = vmatpush.msra.mxu0 0.0
        %1490 = vmatpush.msra.mxu0 0.0
        %1491 = vmatpush.msra.mxu0 0.0
        %1492 = vmatpush.msra.mxu0 0.0
        %1493 = vmatpush.msra.mxu0 0.0
        %1494 = vmatpush.msra.mxu0 0.0
        %1495 = vmatpush.msra.mxu0 0.0
        %1496 = vmatpush.msra.mxu0 0.0
        %1497 = vmatpush.msra.mxu0 0.0
        %1498 = vmatpush.msra.mxu0 %v1355
        %1499 = vmatpush.msra.mxu0 %v1352
        %1500 = vmatpush.msra.mxu0 %v1349
        %1501 = vmatpush.msra.mxu0 %v1346
        %1502 = vmatmul.f32.gmra.mxu0 %v1464
        %v1503 = vpop.f32.mrf.mxu0
        %v1504 = vadd.f32 %v1458, %v1503
        %1505 = vdwg.mxu0
        %1506 = vmatpush.msra.mxu0 0.0
        %1507 = vmatpush.msra.mxu0 0.0
        %1508 = vmatpush.msra.mxu0 0.0
        %1509 = vmatpush.msra.mxu0 0.0
        %1510 = vmatpush.msra.mxu0 0.0
        %1511 = vmatpush.msra.mxu0 0.0
        %1512 = vmatpush.msra.mxu0 0.0
        %1513 = vmatpush.msra.mxu0 0.0
        %1514 = vmatpush.msra.mxu0 0.0
        %1515 = vmatpush.msra.mxu0 0.0
        %1516 = vmatpush.msra.mxu0 0.0
        %1517 = vmatpush.msra.mxu0 0.0
        %1518 = vmatpush.msra.mxu0 %v1356
        %1519 = vmatpush.msra.mxu0 %v1353
        %1520 = vmatpush.msra.mxu0 %v1350
        %1521 = vmatpush.msra.mxu0 %v1347
        %1522 = vmatmul.f32.gmra.mxu0 %v1464
        %v1523 = vpop.f32.mrf.mxu0
        %v1524 = vadd.f32 %v1459, %v1523
        %1525 = vdwg.mxu0
        %v1526 = vmax.f32 %v1484, 0.0
        %v1527 = vmax.f32 %v1504, 0.0
        %v1528 = vmax.f32 %v1524, 0.0
        %s1529 = scalar_lea.vmem %s9, 3
        %v1530 = vld [vmem:[%s1529] sm:$0x1]
        %v1532 = vperm.slane %v1530, 0
        %1534 = vmatpush.msra.mxu0 %v1421
        %1535 = vmatpush.msra.mxu0 %v1420
        %1536 = vmatpush.msra.mxu0 %v1419
        %1537 = vmatpush.msra.mxu0 %v1418
        %1538 = vmatpush.msra.mxu0 %v1417
        %1539 = vmatpush.msra.mxu0 %v1416
        %1540 = vmatpush.msra.mxu0 %v1415
        %1541 = vmatpush.msra.mxu0 %v1414
        %1542 = vmatpush.msra.mxu0 %v1413
        %1543 = vmatpush.msra.mxu0 %v1412
        %1544 = vmatpush.msra.mxu0 %v1411
        %1545 = vmatpush.msra.mxu0 %v1410
        %1546 = vmatpush.msra.mxu0 %v1409
        %1547 = vmatpush.msra.mxu0 %v1408
        %1548 = vmatpush.msra.mxu0 %v1407
        %1549 = vmatpush.msra.mxu0 %v1406
        %1550 = vmatmul.f32.gmra.mxu0 %v1526
        %v1551 = vpop.f32.mrf.mxu0
        %v1552 = vadd.f32 %v1532, %v1551
        %1553 = vdwg.mxu0
        %1554 = vmatpush.msra.mxu0 %v1437
        %1555 = vmatpush.msra.mxu0 %v1436
        %1556 = vmatpush.msra.mxu0 %v1435
        %1557 = vmatpush.msra.mxu0 %v1434
        %1558 = vmatpush.msra.mxu0 %v1433
        %1559 = vmatpush.msra.mxu0 %v1432
        %1560 = vmatpush.msra.mxu0 %v1431
        %1561 = vmatpush.msra.mxu0 %v1430
        %1562 = vmatpush.msra.mxu0 %v1429
        %1563 = vmatpush.msra.mxu0 %v1428
        %1564 = vmatpush.msra.mxu0 %v1427
        %1565 = vmatpush.msra.mxu0 %v1426
        %1566 = vmatpush.msra.mxu0 %v1425
        %1567 = vmatpush.msra.mxu0 %v1424
        %1568 = vmatpush.msra.mxu0 %v1423
        %1569 = vmatpush.msra.mxu0 %v1422
        %1570 = vmatmul.f32.gmra.mxu0 %v1527
        %v1571 = vpop.f32.mrf.mxu0
        %v1572 = vadd.f32 %v1552, %v1571
        %1573 = vdwg.mxu0
        %1574 = vmatpush.msra.mxu0 %v1453
        %1575 = vmatpush.msra.mxu0 %v1452
        %1576 = vmatpush.msra.mxu0 %v1451
        %1577 = vmatpush.msra.mxu0 %v1450
        %1578 = vmatpush.msra.mxu0 %v1449
        %1579 = vmatpush.msra.mxu0 %v1448
        %1580 = vmatpush.msra.mxu0 %v1447
        %1581 = vmatpush.msra.mxu0 %v1446
        %1582 = vmatpush.msra.mxu0 %v1445
        %1583 = vmatpush.msra.mxu0 %v1444
        %1584 = vmatpush.msra.mxu0 %v1443
        %1585 = vmatpush.msra.mxu0 %v1442
        %1586 = vmatpush.msra.mxu0 %v1441
        %1587 = vmatpush.msra.mxu0 %v1440
        %1588 = vmatpush.msra.mxu0 %v1439
        %1589 = vmatpush.msra.mxu0 %v1438
        %1590 = vmatmul.f32.gmra.mxu0 %v1528
        %v1591 = vpop.f32.mrf.mxu0
        %v1592 = vadd.f32 %v1572, %v1591
        %1593 = vdwg.mxu0
        %v1594 = vmax.f32 %v1592, 0.0
        %v1595 = vmul.f32 %v817, %v1335
        %v1596 = vmul.f32 %v817, %v1594
        %v1597 = vmul.f32 %v1076, %v1335
        %v1598 = vmul.f32 %v1076, %v1594
        %1600 = vrot.lane.b32.xlu0 %v1596, 32
        %v1601 = vpop.permute.xlu0 %1600
        %1604 = vrot.lane.b32.xlu0 %v1597, 64
        %v1605 = vpop.permute.xlu0 %1604
        %1608 = vrot.lane.b32.xlu0 %v1598, 96
        %v1609 = vpop.permute.xlu0 %1608
        %v1611 = vsel %vm686, %v1595, %v1601
        %vm1612 = vcmask 523264
        %v1613 = vsel %vm1612, %v1611, %v1605
        %vm1614 = vcmask 785408
        %v1615 = vsel %vm1614, %v1613, %v1609
        %v1616 = vld [vmem:[%s10] sm:$0xf]
        %v1617 = vld [vmem:[%s10 + $0x4] sm:$0xf]
        %v1618 = vld [vmem:[%s10 + $0x8] sm:$0xf]
        %v1619 = vld [vmem:[%s10 + $0xc] sm:$0xf]
        %v1620 = vld [vmem:[%s10 + $0x10] sm:$0xf]
        %v1621 = vld [vmem:[%s10 + $0x14] sm:$0xf]
        %v1622 = vld [vmem:[%s10 + $0x18] sm:$0xf]
        %v1623 = vld [vmem:[%s10 + $0x1c] sm:$0xf]
        %v1624 = vld [vmem:[%s10 + $0x20] sm:$0xf]
        %v1625 = vld [vmem:[%s10 + $0x24] sm:$0xf]
        %v1626 = vld [vmem:[%s10 + $0x28] sm:$0xf]
        %v1627 = vld [vmem:[%s10 + $0x2c] sm:$0xf]
        %v1628 = vld [vmem:[%s10 + $0x30] sm:$0xf]
        %v1629 = vld [vmem:[%s10 + $0x34] sm:$0xf]
        %v1630 = vld [vmem:[%s10 + $0x38] sm:$0xf]
        %v1631 = vld [vmem:[%s10 + $0x3c] sm:$0xf]
        %v1632 = vunpack.c.l.bf16 %v1616
        %v1633 = vunpack.c.l.bf16 %v1617
        %v1634 = vunpack.c.l.bf16 %v1618
        %v1635 = vunpack.c.l.bf16 %v1619
        %v1636 = vunpack.c.l.bf16 %v1620
        %v1637 = vunpack.c.l.bf16 %v1621
        %v1638 = vunpack.c.l.bf16 %v1622
        %v1639 = vunpack.c.l.bf16 %v1623
        %v1640 = vunpack.c.l.bf16 %v1624
        %v1641 = vunpack.c.l.bf16 %v1625
        %v1642 = vunpack.c.l.bf16 %v1626
        %v1643 = vunpack.c.l.bf16 %v1627
        %v1644 = vunpack.c.l.bf16 %v1628
        %v1645 = vunpack.c.l.bf16 %v1629
        %v1646 = vunpack.c.l.bf16 %v1630
        %v1647 = vunpack.c.l.bf16 %v1631
        %v1648 = vld [vmem:[%s11] sm:$0x1]
        %v1650 = vperm.slane %v1648, 0
        %1652 = vmatpush.msra.mxu0 %v1647
        %1653 = vmatpush.msra.mxu0 %v1646
        %1654 = vmatpush.msra.mxu0 %v1645
        %1655 = vmatpush.msra.mxu0 %v1644
        %1656 = vmatpush.msra.mxu0 %v1643
        %1657 = vmatpush.msra.mxu0 %v1642
        %1658 = vmatpush.msra.mxu0 %v1641
        %1659 = vmatpush.msra.mxu0 %v1640
        %1660 = vmatpush.msra.mxu0 %v1639
        %1661 = vmatpush.msra.mxu0 %v1638
        %1662 = vmatpush.msra.mxu0 %v1637
        %1663 = vmatpush.msra.mxu0 %v1636
        %1664 = vmatpush.msra.mxu0 %v1635
        %1665 = vmatpush.msra.mxu0 %v1634
        %1666 = vmatpush.msra.mxu0 %v1633
        %1667 = vmatpush.msra.mxu0 %v1632
        %1668 = vmatmul.f32.gmra.mxu0 %v1615
        %v1669 = vpop.f32.mrf.mxu0
        %v1670 = vadd.f32 %v1650, %v1669
        %1671 = vdwg.mxu0
        %v1672 = vxor.u32 %v1670, 2147483648
        %v1673 = vmul.f32 %v1672, 1.442695
        %v1674 = vpow.pop %v1673
        %v1675 = vadd.f32 %v1674, 1.0
        %v1676 = vrcp.pop %v1675
        %v1677 = vmul.f32 %v1675, %v1676
        %v1678 = vsub.f32 1.0, %v1677
        %v1679 = vmul.f32 %v1676, %v1678
        %v1680 = vadd.f32 %v1676, %v1679
        %vm1681 = vweird.f32 %v1675
        %vm1682 = vweird.f32 %v1676
        %vm1683 = vmor %vm1681, %vm1682
        %v1684 = vsel %vm1683, %v1676, %v1680
        %v1685 = vand.u32 2147483647, %v1675
        %vm1686 = vcmp.eq.f32.partialorder %v1685, 8.507059e+37
        %v1687 = vand.u32 %v1675, 2147483648
        %v1688 = vor.u32 1.1754944e-38, %v1687
        %v1689 = vsel %vm1686, %v1688, %v1684
        %v1690 = vmul.f32 1.0, %v1689
        %1691 = vst [vmem:[%s417] sm:$0xff] %v1690
        %s1692 = sand.u32 %s296, 1
        %s1693 = scalar_lea.sflag [#allocation3], %s1692
        %s1694 = sand.u32 %s296, 1
        %s1695 = smul.addr %s1694, 8
        %s1696 = scalar_lea.vmem [#allocation2], %s1695
        // Predicated region
        $region69: #{tpu_custom_call.1} parent=67 // pred_check
          %p1697 = pneg %p306
        $region70: #{tpu_custom_call.1} parent=67 // pred_check_branch
          %1699 = sbr.rel (%p1697) target = $region72
        $region71: #{tpu_custom_call.1} parent=67 // pred_region
          %1701 = vsyncadd %s1693, 0
          %s1702 = smul.addr %s26, 8
          %s1703 = scalar_lea.hbm %s12, %s1702
          %s1705 = sshll.u32 %s1696, 4
          %s1706 = int_to_ptr.vmem [resolvable:$true] %s1705
          %s1707 = sshll.u32 %s1703, 4
          %s1708 = int_to_ptr.hbm [resolvable:$true] %s1707
          %1710 = dma.vmem_to_hbm [thread:$0]  %s1706, 128, %s1708, %s1693
        $region72: #{tpu_custom_call.1} parent=67 // pred_fallthru
          _
      $region68: #{tpu_custom_call.1} parent=5 // pred_fallthru
        _
      %p1711 = scmp.le.s32.totalorder 2, %s21
      // Predicated region
      $region73: #{tpu_custom_call.1} parent=5 // pred_check
        %p1712 = pneg %p1711
      $region74: #{tpu_custom_call.1} parent=5 // pred_check_branch
        %1714 = sbr.rel (%p1712) target = $region76
      $region75: #{tpu_custom_call.1} parent=5 // pred_region
        %s1715 = ssub.s32 %s21, 2
        // Predicated region
        $region77: #{tpu_custom_call.1} parent=75 // pred_check
          %p1716 = pneg %p312
        $region78: #{tpu_custom_call.1} parent=75 // pred_check_branch
          %1718 = sbr.rel (%p1716) target = $region80
        $region79: #{tpu_custom_call.1} parent=75 // pred_region
          %s1719 = sand.u32 %s297, 1
          %s1720 = scalar_lea.sflag [#allocation3], %s1719
          %s1721 = sand.u32 %s297, 1
          %s1722 = smul.addr %s1721, 8
          %s1723 = scalar_lea.vmem [#allocation2], %s1722
          %1725 = dma.done %s1720, 128
        $region80: #{tpu_custom_call.1} parent=75 // pred_fallthru
          _
      $region76: #{tpu_custom_call.1} parent=5 // pred_fallthru
        _
    $region6: #{tpu_custom_call.1} parent=1 // loop_footer
      %s25 = sadd.s32 1, %s21
    $region7: #{tpu_custom_call.1} parent=1 // loop_footer_branch
      %20 = sbr.rel target = $region3
    $region8: #{tpu_custom_call.1} parent=1 // loop_exit
      _
    %1726 = vsyncpa [#allocation3], 1
    %s1727 = scalar_lea.sflag [#allocation3], 1
    %1728 = vsyncpa %s1727, 1

</llo_original>
